<compile_context>
chip_gen: v5e
topology: v5e:2x2
jax: 0.10.0
libtpu: 0.0.40
codegen_flags: <defaults>
</compile_context>

<pallas_src>
import math

import jax
import jax.numpy as jnp
from jax.experimental import pallas as pl
from jax.experimental.pallas import tpu as pltpu


_SQRT_HALF = 0.7071067811865476


def _round_up(x, m):
    return (x + m - 1) // m * m


def _erf(z):
    """Abramowitz & Stegun 7.1.26 erf approximation (max abs error ~1.5e-7)."""
    a1, a2, a3, a4, a5 = (0.254829592, -0.284496736, 1.421413741,
                          -1.453152027, 1.061405429)
    p = 0.3275911
    az = jnp.abs(z)
    t = 1.0 / (1.0 + p * az)            # one divide; exp below runs on the EUP
    poly = ((((a5 * t + a4) * t + a3) * t + a2) * t + a1) * t
    e = 1.0 - poly * jnp.exp(-az * az)
    return jnp.where(z >= 0, e, -e)


def _gelu_exact(x):
    """Exact (erf-based) GELU, matching torch.nn.functional.gelu default."""
    return 0.5 * x * (1.0 + _erf(x * _SQRT_HALF))


def _ffn_kernel(x_ref, w1_ref, b1_ref, w2_ref, b2_ref, o_ref, acc_ref):
    """Grid = (row_tiles, hidden_tiles).

    x_ref : (TM, E_pad)    compute dtype (bf16 by default)
    w1_ref: (E_pad, TK)    fc1 weight chunk (pre-transposed, padded)
    b1_ref: (1, TK)        f32
    w2_ref: (TK, E_pad)    fc2 weight chunk (pre-transposed, padded)
    b2_ref: (1, E_pad)     f32
    o_ref : (TM, E_pad)
    acc_ref: (TM, E_pad)   f32 accumulator scratch
    """
    k = pl.program_id(1)

    @pl.when(k == 0)
    def _():
        acc_ref[...] = jnp.zeros_like(acc_ref)

    x = x_ref[...]
    # fc1 chunk: (TM, E_pad) @ (E_pad, TK) -> f32 (TM, TK) on the MXU.
    h = jnp.dot(x, w1_ref[...], preferred_element_type=jnp.float32) + b1_ref[...]
    # Exact GELU in f32 (VPU + EUP exp).  Dropout is eval-mode identity.
    g = _gelu_exact(h)
    # fc2 chunk: (TM, TK) @ (TK, E_pad) -> accumulate in f32.
    acc_ref[...] += jnp.dot(g.astype(w2_ref.dtype), w2_ref[...],
                            preferred_element_type=jnp.float32)

    @pl.when(k == pl.num_programs(1) - 1)
    def _():
        o_ref[...] = (acc_ref[...] + b2_ref[...]).astype(o_ref.dtype)


def prepare_params(w1, b1, w2, b2, *, compute_dtype=jnp.bfloat16):
    """One-time parameter prep: transpose to contraction-on-leading-dim layout,
    zero-pad E/H to multiples of 128 (lane-dense, exact), cast to compute dtype.

    PyTorch layout in: w1 (H, E), b1 (H,), w2 (E, H), b2 (E,).
    """
    H, E = w1.shape
    assert w2.shape == (E, H) and b1.shape == (H,) and b2.shape == (E,)
    E_pad = _round_up(E, 128)
    H_pad = _round_up(H, 128)

    w1t = jnp.pad(jnp.asarray(w1, jnp.float32).T,
                  ((0, E_pad - E), (0, H_pad - H))).astype(compute_dtype)   # (E_pad, H_pad)
    w2t = jnp.pad(jnp.asarray(w2, jnp.float32).T,
                  ((0, H_pad - H), (0, E_pad - E))).astype(compute_dtype)   # (H_pad, E_pad)
    b1p = jnp.pad(jnp.asarray(b1, jnp.float32), (0, H_pad - H)).reshape(1, H_pad)
    b2p = jnp.pad(jnp.asarray(b2, jnp.float32), (0, E_pad - E)).reshape(1, E_pad)

    return {"w1t": w1t, "b1": b1p, "w2t": w2t, "b2": b2p,
            "embed_dim": E, "hidden_dim": H}


def feed_forward(x, params, *, block_rows=256, block_hidden=512):
    """x: (B, S, E). Returns (B, S, E), eval-mode FeedForward forward pass."""
    w1t, b1p, w2t, b2p = params["w1t"], params["b1"], params["w2t"], params["b2"]
    E = params["embed_dim"]
    B, S, E_in = x.shape
    assert E_in == E
    E_pad, H_pad = w1t.shape
    compute_dtype = w1t.dtype

    rows = B * S
    tm = block_rows                            # fixed, multiple of 128 (256 fills v6e/v7x MXU rows)
    padded_rows = _round_up(rows, tm)          # host-side zero row padding, sliced off below
    tk = math.gcd(H_pad, _round_up(block_hidden, 128))   # multiple of 128, divides H_pad

    x2 = x.reshape(rows, E)
    x2 = jnp.pad(x2, ((0, padded_rows - rows), (0, E_pad - E))).astype(compute_dtype)

    out_dtype = x.dtype
    out_isz = jnp.dtype(out_dtype).itemsize
    cd_isz = jnp.dtype(compute_dtype).itemsize

    # VMEM budget: streamed tiles double-buffered, f32 accumulator, fc2 bias single-buffered.
    est_vmem = (2 * tm * E_pad * cd_isz        # x tile
                + 2 * E_pad * tk * cd_isz      # w1 tile
                + 2 * tk * E_pad * cd_isz      # w2 tile
                + 2 * tk * 4 + E_pad * 4       # biases
                + 2 * tm * E_pad * out_isz     # out tile
                + tm * E_pad * 4)              # accumulator scratch
    vmem_limit = int(min(64 * 2**20, max(8 * 2**20, 2 * est_vmem)))

    cost = pl.CostEstimate(
        flops=4 * padded_rows * E_pad * H_pad,             # two matmuls
        transcendentals=padded_rows * H_pad,               # one exp per hidden element
        bytes_accessed=(padded_rows * E_pad * (cd_isz + out_isz)
                        + 2 * E_pad * H_pad * cd_isz
                        + (H_pad + E_pad) * 4),
    )

    grid = (padded_rows // tm, H_pad // tk)

    out2 = pl.pallas_call(
        _ffn_kernel,
        out_shape=jax.ShapeDtypeStruct((padded_rows, E_pad), out_dtype),
        grid_spec=pltpu.PrefetchScalarGridSpec(
            num_scalar_prefetch=0,
            grid=grid,
            in_specs=[
                pl.BlockSpec((tm, E_pad), lambda i, k: (i, 0)),      # x rows
                pl.BlockSpec((E_pad, tk), lambda i, k: (0, k)),      # fc1 weight chunk
                pl.BlockSpec((1, tk), lambda i, k: (0, k)),          # fc1 bias chunk
                pl.BlockSpec((tk, E_pad), lambda i, k: (k, 0)),      # fc2 weight chunk
                pl.BlockSpec((1, E_pad), lambda i, k: (0, 0),
                             pipeline_mode=pl.Buffered(1)),          # fc2 bias (grid-invariant)
            ],
            out_specs=pl.BlockSpec((tm, E_pad), lambda i, k: (i, 0)),
            scratch_shapes=[pltpu.VMEM((tm, E_pad), jnp.float32)],
        ),
        compiler_params=pltpu.CompilerParams(
            dimension_semantics=("parallel", "arbitrary"),
            vmem_limit_bytes=vmem_limit),
        cost_estimate=cost,
    )(x2, w1t, b1p, w2t, b2p)

    return out2[:rows, :E].reshape(B, S, E)


def _reference_ffn(x, w1, b1, w2, b2):
    """Plain-JAX reference matching the PyTorch FeedForward in eval mode."""
    h = jnp.einsum("bse,he->bsh", x, w1) + b1
    g = jax.nn.gelu(h, approximate=False)     # exact GELU (erf), like F.gelu default
    return jnp.einsum("bsh,eh->bse", g, w2) + b2


if __name__ == "__main__":
    # Small shapes consistent with the module: embed_dim=32, hidden_dim=64.
    B, S, E, HID = 2, 8, 32, 64

    key = jax.random.PRNGKey(0)
    kx, kw1, kb1, kw2, kb2 = jax.random.split(key, 5)

    # PyTorch nn.Linear-style init: U(-1/sqrt(fan_in), 1/sqrt(fan_in)).
    bnd1 = 1.0 / (E ** 0.5)
    bnd2 = 1.0 / (HID ** 0.5)
    w1 = jax.random.uniform(kw1, (HID, E), jnp.float32, -bnd1, bnd1)
    b1 = jax.random.uniform(kb1, (HID,), jnp.float32, -bnd1, bnd1)
    w2 = jax.random.uniform(kw2, (E, HID), jnp.float32, -bnd2, bnd2)
    b2 = jax.random.uniform(kb2, (E,), jnp.float32, -bnd2, bnd2)

    x = jax.random.normal(kx, (B, S, E), jnp.float32)

    ref = _reference_ffn(x, w1, b1, w2, b2)

    # 1) f32 MXU path: tight numerical check of the fused structure / exact GELU.
    params_f32 = prepare_params(w1, b1, w2, b2, compute_dtype=jnp.float32)
    out_f32 = jax.block_until_ready(feed_forward(x, params_f32))
    assert out_f32.shape == (B, S, E)
    assert jnp.allclose(out_f32, ref, atol=2e-5, rtol=2e-5), (
        float(jnp.max(jnp.abs(out_f32 - ref))))

    # 2) bf16 MXU operands + f32 accumulation (production default): looser tolerance.
    params_bf16 = prepare_params(w1, b1, w2, b2)
    out_bf16 = jax.block_until_ready(feed_forward(x, params_bf16))
    assert out_bf16.shape == (B, S, E)
    assert jnp.allclose(out_bf16, ref, atol=5e-2, rtol=5e-2), (
        float(jnp.max(jnp.abs(out_bf16 - ref))))

    print("KERNEL_OK")
</pallas_src>

<mosaic_0001>
module attributes {stable_mosaic.version = 11 : i64} {
  func.func @_ffn_kernel(%arg0: i32, %arg1: i32, %arg2: memref<256x128xf32, #tpu.memory_space<vmem>>, %arg3: memref<128x128xf32, #tpu.memory_space<vmem>>, %arg4: memref<1x128xf32, #tpu.memory_space<vmem>>, %arg5: memref<128x128xf32, #tpu.memory_space<vmem>>, %arg6: memref<1x128xf32, #tpu.memory_space<vmem>>, %arg7: memref<256x128xf32, #tpu.memory_space<vmem>>, %arg8: memref<256x128xf32, #tpu.memory_space<vmem>>) attributes {dimension_semantics = [#tpu.dimension_semantics<parallel>, #tpu.dimension_semantics<arbitrary>], iteration_bounds = array<i64: 1, 1>, scalar_prefetch = 0 : i64, scratch_operands = 1 : i64, tpu.core_type = #tpu.core_type<tc>, window_params = [{transform_indices = @transform_0, window_bounds = array<i64: 256, 128>}, {transform_indices = @transform_1, window_bounds = array<i64: 128, 128>}, {transform_indices = @transform_2, window_bounds = array<i64: 1, 128>}, {transform_indices = @transform_3, window_bounds = array<i64: 128, 128>}, {pipeline_mode = #tpu.pipeline_mode<synchronous>, transform_indices = @transform_4, window_bounds = array<i64: 1, 128>}, {transform_indices = @transform_5, window_bounds = array<i64: 256, 128>}]} {
    %c0_i32 = arith.constant 0 : i32
    %0 = arith.cmpi eq, %arg1, %c0_i32 : i32
    %1 = arith.extui %0 : i1 to i32
    %c0_i32_0 = arith.constant 0 : i32
    %2 = arith.cmpi ne, %1, %c0_i32_0 : i32
    scf.if %2 {
      %cst_30 = arith.constant 0.000000e+00 : f32
      %57 = vector.broadcast %cst_30 : f32 to vector<256x128xf32>
      %c0_31 = arith.constant 0 : index
      %c0_32 = arith.constant 0 : index
      %58 = vector.load %arg8[%c0_31, %c0_32] : memref<256x128xf32, #tpu.memory_space<vmem>>, vector<256x128xf32>
      tpu.vector_store %arg8[%c0_31, %c0_32], %57 {strides = array<i32>} : memref<256x128xf32, #tpu.memory_space<vmem>>, vector<256x128xf32>,
    } else {
    }
    %c0 = arith.constant 0 : index
    %c0_1 = arith.constant 0 : index
    %3 = vector.load %arg2[%c0, %c0_1] : memref<256x128xf32, #tpu.memory_space<vmem>>, vector<256x128xf32>
    %c0_2 = arith.constant 0 : index
    %c0_3 = arith.constant 0 : index
    %4 = vector.load %arg3[%c0_2, %c0_3] : memref<128x128xf32, #tpu.memory_space<vmem>>, vector<128x128xf32>
    %cst = arith.constant dense<0.000000e+00> : vector<256x128xf32>
    %5 = tpu.matmul %3, %4, %cst {dimension_numbers = #tpu.dot_dimension_numbers<[1], [0], [0], [1], [0, 0, 1, 1], [], []>} : vector<256x128xf32>, vector<128x128xf32>, vector<256x128xf32> -> vector<256x128xf32>
    %c0_4 = arith.constant 0 : index
    %c0_5 = arith.constant 0 : index
    %6 = vector.load %arg4[%c0_4, %c0_5] : memref<1x128xf32, #tpu.memory_space<vmem>>, vector<1x128xf32>
    %7 = vector.broadcast %6 : vector<1x128xf32> to vector<256x128xf32>
    %8 = arith.addf %5, %7 : vector<256x128xf32>
    %cst_6 = arith.constant 5.000000e-01 : f32
    %9 = vector.broadcast %cst_6 : f32 to vector<256x128xf32>
    %10 = arith.mulf %9, %8 : vector<256x128xf32>
    %cst_7 = arith.constant 0.707106769 : f32
    %11 = vector.broadcast %cst_7 : f32 to vector<256x128xf32>
    %12 = arith.mulf %8, %11 : vector<256x128xf32>
    %13 = math.absf %12 : vector<256x128xf32>
    %cst_8 = arith.constant 0.327591091 : f32
    %14 = vector.broadcast %cst_8 : f32 to vector<256x128xf32>
    %15 = arith.mulf %14, %13 : vector<256x128xf32>
    %cst_9 = arith.constant 1.000000e+00 : f32
    %16 = vector.broadcast %cst_9 : f32 to vector<256x128xf32>
    %17 = arith.addf %16, %15 : vector<256x128xf32>
    %cst_10 = arith.constant 1.000000e+00 : f32
    %18 = vector.broadcast %cst_10 : f32 to vector<256x128xf32>
    %19 = arith.divf %18, %17 : vector<256x128xf32>
    %cst_11 = arith.constant 1.06140542 : f32
    %20 = vector.broadcast %cst_11 : f32 to vector<256x128xf32>
    %21 = arith.mulf %20, %19 : vector<256x128xf32>
    %cst_12 = arith.constant -1.45315206 : f32
    %22 = vector.broadcast %cst_12 : f32 to vector<256x128xf32>
    %23 = arith.addf %21, %22 : vector<256x128xf32>
    %24 = arith.mulf %23, %19 : vector<256x128xf32>
    %cst_13 = arith.constant 1.42141378 : f32
    %25 = vector.broadcast %cst_13 : f32 to vector<256x128xf32>
    %26 = arith.addf %24, %25 : vector<256x128xf32>
    %27 = arith.mulf %26, %19 : vector<256x128xf32>
    %cst_14 = arith.constant -0.284496725 : f32
    %28 = vector.broadcast %cst_14 : f32 to vector<256x128xf32>
    %29 = arith.addf %27, %28 : vector<256x128xf32>
    %30 = arith.mulf %29, %19 : vector<256x128xf32>
    %cst_15 = arith.constant 0.254829586 : f32
    %31 = vector.broadcast %cst_15 : f32 to vector<256x128xf32>
    %32 = arith.addf %30, %31 : vector<256x128xf32>
    %33 = arith.mulf %32, %19 : vector<256x128xf32>
    %cst_16 = arith.constant 0.000000e+00 : f32
    %34 = vector.broadcast %cst_16 : f32 to vector<256x128xf32>
    %35 = arith.subf %34, %13 : vector<256x128xf32>
    %36 = arith.mulf %35, %13 : vector<256x128xf32>
    %37 = math.exp %36 : vector<256x128xf32>
    %38 = arith.mulf %33, %37 : vector<256x128xf32>
    %cst_17 = arith.constant 1.000000e+00 : f32
    %39 = vector.broadcast %cst_17 : f32 to vector<256x128xf32>
    %40 = arith.subf %39, %38 : vector<256x128xf32>
    %cst_18 = arith.constant 0.000000e+00 : f32
    %41 = vector.broadcast %cst_18 : f32 to vector<256x128xf32>
    %42 = arith.cmpf oge, %12, %41 : vector<256x128xf32>
    %cst_19 = arith.constant 0.000000e+00 : f32
    %43 = vector.broadcast %cst_19 : f32 to vector<256x128xf32>
    %44 = arith.subf %43, %40 : vector<256x128xf32>
    %45 = arith.select %42, %40, %44 : vector<256x128xi1>, vector<256x128xf32>
    %cst_20 = arith.constant 1.000000e+00 : f32
    %46 = vector.broadcast %cst_20 : f32 to vector<256x128xf32>
    %47 = arith.addf %46, %45 : vector<256x128xf32>
    %48 = arith.mulf %10, %47 : vector<256x128xf32>
    %c0_21 = arith.constant 0 : index
    %c0_22 = arith.constant 0 : index
    %49 = vector.load %arg8[%c0_21, %c0_22] : memref<256x128xf32, #tpu.memory_space<vmem>>, vector<256x128xf32>
    %c0_23 = arith.constant 0 : index
    %c0_24 = arith.constant 0 : index
    %50 = vector.load %arg5[%c0_23, %c0_24] : memref<128x128xf32, #tpu.memory_space<vmem>>, vector<128x128xf32>
    %cst_25 = arith.constant dense<0.000000e+00> : vector<256x128xf32>
    %51 = tpu.matmul %48, %50, %cst_25 {dimension_numbers = #tpu.dot_dimension_numbers<[1], [0], [0], [1], [0, 0, 1, 1], [], []>} : vector<256x128xf32>, vector<128x128xf32>, vector<256x128xf32> -> vector<256x128xf32>
    %52 = arith.addf %49, %51 : vector<256x128xf32>
    %c0_26 = arith.constant 0 : index
    %c0_27 = arith.constant 0 : index
    %53 = vector.load %arg8[%c0_26, %c0_27] : memref<256x128xf32, #tpu.memory_space<vmem>>, vector<256x128xf32>
    tpu.vector_store %arg8[%c0_26, %c0_27], %52 {strides = array<i32>} : memref<256x128xf32, #tpu.memory_space<vmem>>, vector<256x128xf32>,
    %c0_i32_28 = arith.constant 0 : i32
    %54 = arith.cmpi eq, %arg1, %c0_i32_28 : i32
    %55 = arith.extui %54 : i1 to i32
    %c0_i32_29 = arith.constant 0 : i32
    %56 = arith.cmpi ne, %55, %c0_i32_29 : i32
    scf.if %56 {
      %c0_30 = arith.constant 0 : index
      %c0_31 = arith.constant 0 : index
      %57 = vector.load %arg8[%c0_30, %c0_31] : memref<256x128xf32, #tpu.memory_space<vmem>>, vector<256x128xf32>
      %c0_32 = arith.constant 0 : index
      %c0_33 = arith.constant 0 : index
      %58 = vector.load %arg6[%c0_32, %c0_33] : memref<1x128xf32, #tpu.memory_space<vmem>>, vector<1x128xf32>
      %59 = vector.broadcast %58 : vector<1x128xf32> to vector<256x128xf32>
      %60 = arith.addf %57, %59 : vector<256x128xf32>
      %c0_34 = arith.constant 0 : index
      %c0_35 = arith.constant 0 : index
      %61 = vector.load %arg7[%c0_34, %c0_35] : memref<256x128xf32, #tpu.memory_space<vmem>>, vector<256x128xf32>
      tpu.vector_store %arg7[%c0_34, %c0_35], %60 {strides = array<i32>} : memref<256x128xf32, #tpu.memory_space<vmem>>, vector<256x128xf32>,
    } else {
    }
    return
  }
  func.func @transform_0(%arg0: i32, %arg1: i32) -> (i32, i32) {
    %c0_i32 = arith.constant 0 : i32
    %c0_i32_0 = arith.constant 0 : i32
    return %arg0, %c0_i32 : i32, i32
  }
  func.func @transform_1(%arg0: i32, %arg1: i32) -> (i32, i32) {
    %c0_i32 = arith.constant 0 : i32
    %c0_i32_0 = arith.constant 0 : i32
    return %c0_i32, %arg1 : i32, i32
  }
  func.func @transform_2(%arg0: i32, %arg1: i32) -> (i32, i32) {
    %c0_i32 = arith.constant 0 : i32
    %c0_i32_0 = arith.constant 0 : i32
    return %c0_i32, %arg1 : i32, i32
  }
  func.func @transform_3(%arg0: i32, %arg1: i32) -> (i32, i32) {
    %c0_i32 = arith.constant 0 : i32
    %c0_i32_0 = arith.constant 0 : i32
    return %arg1, %c0_i32 : i32, i32
  }
  func.func @transform_4(%arg0: i32, %arg1: i32) -> (i32, i32) {
    %c0_i32 = arith.constant 0 : i32
    %c0_i32_0 = arith.constant 0 : i32
    %c0_i32_1 = arith.constant 0 : i32
    return %c0_i32, %c0_i32_0 : i32, i32
  }
  func.func @transform_5(%arg0: i32, %arg1: i32) -> (i32, i32) {
    %c0_i32 = arith.constant 0 : i32
    %c0_i32_0 = arith.constant 0 : i32
    return %arg0, %c0_i32 : i32, i32
  }
}

</mosaic_0001>

<llo_original>
// kernel: tpu_custom_call.1
$region0: #{tpu_custom_call.1}
  #allocation0 [shape = 'u32[]', space=smem, size = 0x4, offset = 0x4, fixed_abs, tag = 'smem constant byte address 0x4 - core index']
  #allocation1 [shape = 'u32[72,128]{1,0:T(1,128)}', space=vmem, size = 0x9000, scoped, tag = 'internal scratch']
  #allocation2 [shape = 'f32[256,128]{1,0:T(8,128)}', space=vmem, size = 0x20000, scoped, tag = 'scratch operand']
  %s0 = inlined_call_operand.hbm [shape: f32[256,128], index: 0, kind: input, shape index: {}]
  %s1 = inlined_call_operand.hbm [shape: f32[128,128], index: 1, kind: input, shape index: {}]
  %s2 = inlined_call_operand.vmem [shape: f32[1,128], index: 2, kind: input, shape index: {}]
  %s3 = inlined_call_operand.hbm [shape: f32[128,128], index: 3, kind: input, shape index: {}]
  %s4 = inlined_call_operand.vmem [shape: f32[1,128], index: 4, kind: input, shape index: {}]
  %s5 = inlined_call_operand.hbm [shape: f32[256,128], index: 5, kind: output, shape index: {}]
  %s6 = sld [smem:[#allocation0]]
  $region50: #{tpu_custom_call.1} parent=0
    _
  %s8 = ssub.s32 1, %s6
  %s9 = scalar_select 0, %s8, %s6
  $region1: #{tpu_custom_call.1} parent=0
    #allocation3 [shape = 'u8[131072]{0}', space=vmem, size = 0x20000, scoped, tag = 'input window, operand 0, single buffered']
    #allocation4 [shape = 's32[1]{0}', space=sflag, size = 0x4, scoped, tag = 'scoped memory for tpu_custom_call.1']
    #allocation5 [shape = 's32[1]{0}', space=sflag, size = 0x4, scoped, tag = 'scoped memory for tpu_custom_call.1']
    #allocation6 [shape = 'u8[65536]{0}', space=vmem, size = 0x10000, scoped, tag = 'input window, operand 1, single buffered']
    #allocation7 [shape = 's32[1]{0}', space=sflag, size = 0x4, scoped, tag = 'scoped memory for tpu_custom_call.1']
    #allocation8 [shape = 'u8[65536]{0}', space=vmem, size = 0x10000, scoped, tag = 'input window, operand 3, single buffered']
    #allocation9 [shape = 'u8[131072]{0}', space=vmem, size = 0x20000, scoped, tag = 'output window, operand 0, single buffered']
    %10 = vsyncpa [#allocation4], 0
    %11 = vsyncpa [#allocation7], 0
    %12 = vsyncpa [#allocation5], 0
    // Predicated region
    $region2: #{tpu_custom_call.1} parent=1 // pred_check
      _
    $region3: #{tpu_custom_call.1} parent=1 // pred_check_branch
      %14 = sbr.rel (0) target = $region5
    $region4: #{tpu_custom_call.1} parent=1 // pred_region
      %16 = vsyncadd [#allocation4], 0
      %s17 = sshll.u32 %s0, 4
      %s18 = int_to_ptr.hbm [resolvable:$true] %s17
      %s19 = sshll.u32 [#allocation3], 4
      %s20 = int_to_ptr.vmem [resolvable:$true] %s19
      %25 = dma.hbm_to_vmem [thread:$0]  %s18, 4096, %s20, [#allocation4], 128, 128, 8
    $region5: #{tpu_custom_call.1} parent=1 // pred_fallthru
      _
    // Predicated region
    $region6: #{tpu_custom_call.1} parent=1 // pred_check
      _
    $region7: #{tpu_custom_call.1} parent=1 // pred_check_branch
      %27 = sbr.rel (0) target = $region9
    $region8: #{tpu_custom_call.1} parent=1 // pred_region
      %29 = vsyncadd [#allocation7], 0
      %s30 = sshll.u32 %s1, 4
      %s31 = int_to_ptr.hbm [resolvable:$true] %s30
      %s32 = sshll.u32 [#allocation6], 4
      %s33 = int_to_ptr.vmem [resolvable:$true] %s32
      %38 = dma.hbm_to_vmem [thread:$0]  %s31, 2048, %s33, [#allocation7], 128, 128, 8
    $region9: #{tpu_custom_call.1} parent=1 // pred_fallthru
      _
    // Predicated region
    $region10: #{tpu_custom_call.1} parent=1 // pred_check
      _
    $region11: #{tpu_custom_call.1} parent=1 // pred_check_branch
      %40 = sbr.rel (0) target = $region13
    $region12: #{tpu_custom_call.1} parent=1 // pred_region
      _
    $region13: #{tpu_custom_call.1} parent=1 // pred_fallthru
      _
    // Predicated region
    $region14: #{tpu_custom_call.1} parent=1 // pred_check
      _
    $region15: #{tpu_custom_call.1} parent=1 // pred_check_branch
      %42 = sbr.rel (0) target = $region17
    $region16: #{tpu_custom_call.1} parent=1 // pred_region
      %44 = vsyncadd [#allocation7], 0
      %s45 = sshll.u32 %s3, 4
      %s46 = int_to_ptr.hbm [resolvable:$true] %s45
      %s47 = sshll.u32 [#allocation8], 4
      %s48 = int_to_ptr.vmem [resolvable:$true] %s47
      %53 = dma.hbm_to_vmem [thread:$0]  %s46, 2048, %s48, [#allocation7], 128, 128, 8
    $region17: #{tpu_custom_call.1} parent=1 // pred_fallthru
      _
    // Predicated region
    $region18: #{tpu_custom_call.1} parent=1 // pred_check
      _
    $region19: #{tpu_custom_call.1} parent=1 // pred_check_branch
      %55 = sbr.rel (0) target = $region21
    $region20: #{tpu_custom_call.1} parent=1 // pred_region
      _
    $region21: #{tpu_custom_call.1} parent=1 // pred_fallthru
      _
    // Predicated region
    $region22: #{tpu_custom_call.1} parent=1 // pred_check
      _
    $region23: #{tpu_custom_call.1} parent=1 // pred_check_branch
      %57 = sbr.rel (0) target = $region25
    $region24: #{tpu_custom_call.1} parent=1 // pred_region
      %59 = dma.done [#allocation4], 4096
    $region25: #{tpu_custom_call.1} parent=1 // pred_fallthru
      _
    // Predicated region
    $region26: #{tpu_custom_call.1} parent=1 // pred_check
      _
    $region27: #{tpu_custom_call.1} parent=1 // pred_check_branch
      %61 = sbr.rel (0) target = $region29
    $region28: #{tpu_custom_call.1} parent=1 // pred_region
      %63 = dma.done [#allocation7], 2048
    $region29: #{tpu_custom_call.1} parent=1 // pred_fallthru
      _
    // Predicated region
    $region30: #{tpu_custom_call.1} parent=1 // pred_check
      _
    $region31: #{tpu_custom_call.1} parent=1 // pred_check_branch
      %65 = sbr.rel (0) target = $region33
    $region32: #{tpu_custom_call.1} parent=1 // pred_region
      %67 = dma.done [#allocation7], 2048
    $region33: #{tpu_custom_call.1} parent=1 // pred_fallthru
      _
    %p68 = scmp.eq.s32.totalorder 0, 0
    // Predicated region
    $region34: #{tpu_custom_call.1} parent=1 // pred_check
      %p69 = pneg %p68
    $region35: #{tpu_custom_call.1} parent=1 // pred_check_branch
      %71 = sbr.rel (%p69) target = $region37
    $region36: #{tpu_custom_call.1} parent=1 // pred_region
      %72 = vst [vmem:[#allocation2] sm:$0xff] 0.0
      %73 = vst [vmem:[#allocation2 + $0x8] sm:$0xff] 0.0
      %74 = vst [vmem:[#allocation2 + $0x10] sm:$0xff] 0.0
      %75 = vst [vmem:[#allocation2 + $0x18] sm:$0xff] 0.0
      %76 = vst [vmem:[#allocation2 + $0x20] sm:$0xff] 0.0
      %77 = vst [vmem:[#allocation2 + $0x28] sm:$0xff] 0.0
      %78 = vst [vmem:[#allocation2 + $0x30] sm:$0xff] 0.0
      %79 = vst [vmem:[#allocation2 + $0x38] sm:$0xff] 0.0
      %80 = vst [vmem:[#allocation2 + $0x40] sm:$0xff] 0.0
      %81 = vst [vmem:[#allocation2 + $0x48] sm:$0xff] 0.0
      %82 = vst [vmem:[#allocation2 + $0x50] sm:$0xff] 0.0
      %83 = vst [vmem:[#allocation2 + $0x58] sm:$0xff] 0.0
      %84 = vst [vmem:[#allocation2 + $0x60] sm:$0xff] 0.0
      %85 = vst [vmem:[#allocation2 + $0x68] sm:$0xff] 0.0
      %86 = vst [vmem:[#allocation2 + $0x70] sm:$0xff] 0.0
      %87 = vst [vmem:[#allocation2 + $0x78] sm:$0xff] 0.0
      %88 = vst [vmem:[#allocation2 + $0x80] sm:$0xff] 0.0
      %89 = vst [vmem:[#allocation2 + $0x88] sm:$0xff] 0.0
      %90 = vst [vmem:[#allocation2 + $0x90] sm:$0xff] 0.0
      %91 = vst [vmem:[#allocation2 + $0x98] sm:$0xff] 0.0
      %92 = vst [vmem:[#allocation2 + $0xa0] sm:$0xff] 0.0
      %93 = vst [vmem:[#allocation2 + $0xa8] sm:$0xff] 0.0
      %94 = vst [vmem:[#allocation2 + $0xb0] sm:$0xff] 0.0
      %95 = vst [vmem:[#allocation2 + $0xb8] sm:$0xff] 0.0
      %96 = vst [vmem:[#allocation2 + $0xc0] sm:$0xff] 0.0
      %97 = vst [vmem:[#allocation2 + $0xc8] sm:$0xff] 0.0
      %98 = vst [vmem:[#allocation2 + $0xd0] sm:$0xff] 0.0
      %99 = vst [vmem:[#allocation2 + $0xd8] sm:$0xff] 0.0
      %100 = vst [vmem:[#allocation2 + $0xe0] sm:$0xff] 0.0
      %101 = vst [vmem:[#allocation2 + $0xe8] sm:$0xff] 0.0
      %102 = vst [vmem:[#allocation2 + $0xf0] sm:$0xff] 0.0
      %103 = vst [vmem:[#allocation2 + $0xf8] sm:$0xff] 0.0
    $region37: #{tpu_custom_call.1} parent=1 // pred_fallthru
      _
    %v104 = vld [vmem:[#allocation3] sm:$0xff]
    %v105 = vld [vmem:[#allocation3 + $0x8] sm:$0xff]
    %v106 = vld [vmem:[#allocation3 + $0x10] sm:$0xff]
    %v107 = vld [vmem:[#allocation3 + $0x18] sm:$0xff]
    %v108 = vld [vmem:[#allocation3 + $0x20] sm:$0xff]
    %v109 = vld [vmem:[#allocation3 + $0x28] sm:$0xff]
    %v110 = vld [vmem:[#allocation3 + $0x30] sm:$0xff]
    %v111 = vld [vmem:[#allocation3 + $0x38] sm:$0xff]
    %v112 = vld [vmem:[#allocation3 + $0x40] sm:$0xff]
    %v113 = vld [vmem:[#allocation3 + $0x48] sm:$0xff]
    %v114 = vld [vmem:[#allocation3 + $0x50] sm:$0xff]
    %v115 = vld [vmem:[#allocation3 + $0x58] sm:$0xff]
    %v116 = vld [vmem:[#allocation3 + $0x60] sm:$0xff]
    %v117 = vld [vmem:[#allocation3 + $0x68] sm:$0xff]
    %v118 = vld [vmem:[#allocation3 + $0x70] sm:$0xff]
    %v119 = vld [vmem:[#allocation3 + $0x78] sm:$0xff]
    %v120 = vld [vmem:[#allocation3 + $0x80] sm:$0xff]
    %v121 = vld [vmem:[#allocation3 + $0x88] sm:$0xff]
    %v122 = vld [vmem:[#allocation3 + $0x90] sm:$0xff]
    %v123 = vld [vmem:[#allocation3 + $0x98] sm:$0xff]
    %v124 = vld [vmem:[#allocation3 + $0xa0] sm:$0xff]
    %v125 = vld [vmem:[#allocation3 + $0xa8] sm:$0xff]
    %v126 = vld [vmem:[#allocation3 + $0xb0] sm:$0xff]
    %v127 = vld [vmem:[#allocation3 + $0xb8] sm:$0xff]
    %v128 = vld [vmem:[#allocation3 + $0xc0] sm:$0xff]
    %v129 = vld [vmem:[#allocation3 + $0xc8] sm:$0xff]
    %v130 = vld [vmem:[#allocation3 + $0xd0] sm:$0xff]
    %v131 = vld [vmem:[#allocation3 + $0xd8] sm:$0xff]
    %v132 = vld [vmem:[#allocation3 + $0xe0] sm:$0xff]
    %v133 = vld [vmem:[#allocation3 + $0xe8] sm:$0xff]
    %v134 = vld [vmem:[#allocation3 + $0xf0] sm:$0xff]
    %v135 = vld [vmem:[#allocation3 + $0xf8] sm:$0xff]
    %v136 = vld [vmem:[#allocation6] sm:$0xff]
    %v137 = vld [vmem:[#allocation6 + $0x8] sm:$0xff]
    %v138 = vld [vmem:[#allocation6 + $0x10] sm:$0xff]
    %v139 = vld [vmem:[#allocation6 + $0x18] sm:$0xff]
    %v140 = vld [vmem:[#allocation6 + $0x20] sm:$0xff]
    %v141 = vld [vmem:[#allocation6 + $0x28] sm:$0xff]
    %v142 = vld [vmem:[#allocation6 + $0x30] sm:$0xff]
    %v143 = vld [vmem:[#allocation6 + $0x38] sm:$0xff]
    %v144 = vld [vmem:[#allocation6 + $0x40] sm:$0xff]
    %v145 = vld [vmem:[#allocation6 + $0x48] sm:$0xff]
    %v146 = vld [vmem:[#allocation6 + $0x50] sm:$0xff]
    %v147 = vld [vmem:[#allocation6 + $0x58] sm:$0xff]
    %v148 = vld [vmem:[#allocation6 + $0x60] sm:$0xff]
    %v149 = vld [vmem:[#allocation6 + $0x68] sm:$0xff]
    %v150 = vld [vmem:[#allocation6 + $0x70] sm:$0xff]
    %v151 = vld [vmem:[#allocation6 + $0x78] sm:$0xff]
    %v152 = vld [vmem:[%s2] sm:$0x1]
    %v154 = vperm.slane %v152, 0
    %156 = vmatpush.msra.mxu0 %v151
    %157 = vmatpush.msra.mxu0 %v150
    %158 = vmatpush.msra.mxu0 %v149
    %159 = vmatpush.msra.mxu0 %v148
    %160 = vmatpush.msra.mxu0 %v147
    %161 = vmatpush.msra.mxu0 %v146
    %162 = vmatpush.msra.mxu0 %v145
    %163 = vmatpush.msra.mxu0 %v144
    %164 = vmatpush.msra.mxu0 %v143
    %165 = vmatpush.msra.mxu0 %v142
    %166 = vmatpush.msra.mxu0 %v141
    %167 = vmatpush.msra.mxu0 %v140
    %168 = vmatpush.msra.mxu0 %v139
    %169 = vmatpush.msra.mxu0 %v138
    %170 = vmatpush.msra.mxu0 %v137
    %171 = vmatpush.msra.mxu0 %v136
    %172 = vmatmul.f32.gmra.mxu0 %v104
    %v173 = vpop.f32.mrf.mxu0
    %v174 = vadd.f32 %v154, %v173
    %175 = vmatmul.f32.gmra.mxu0 %v105
    %v176 = vpop.f32.mrf.mxu0
    %v177 = vadd.f32 %v154, %v176
    %178 = vmatmul.f32.gmra.mxu0 %v106
    %v179 = vpop.f32.mrf.mxu0
    %v180 = vadd.f32 %v154, %v179
    %181 = vmatmul.f32.gmra.mxu0 %v107
    %v182 = vpop.f32.mrf.mxu0
    %v183 = vadd.f32 %v154, %v182
    %184 = vmatmul.f32.gmra.mxu0 %v108
    %v185 = vpop.f32.mrf.mxu0
    %v186 = vadd.f32 %v154, %v185
    %187 = vmatmul.f32.gmra.mxu0 %v109
    %v188 = vpop.f32.mrf.mxu0
    %v189 = vadd.f32 %v154, %v188
    %190 = vmatmul.f32.gmra.mxu0 %v110
    %v191 = vpop.f32.mrf.mxu0
    %v192 = vadd.f32 %v154, %v191
    %193 = vmatmul.f32.gmra.mxu0 %v111
    %v194 = vpop.f32.mrf.mxu0
    %v195 = vadd.f32 %v154, %v194
    %196 = vmatmul.f32.gmra.mxu0 %v112
    %v197 = vpop.f32.mrf.mxu0
    %v198 = vadd.f32 %v154, %v197
    %199 = vmatmul.f32.gmra.mxu0 %v113
    %v200 = vpop.f32.mrf.mxu0
    %v201 = vadd.f32 %v154, %v200
    %202 = vmatmul.f32.gmra.mxu0 %v114
    %v203 = vpop.f32.mrf.mxu0
    %v204 = vadd.f32 %v154, %v203
    %205 = vmatmul.f32.gmra.mxu0 %v115
    %v206 = vpop.f32.mrf.mxu0
    %v207 = vadd.f32 %v154, %v206
    %208 = vmatmul.f32.gmra.mxu0 %v116
    %v209 = vpop.f32.mrf.mxu0
    %v210 = vadd.f32 %v154, %v209
    %211 = vmatmul.f32.gmra.mxu0 %v117
    %v212 = vpop.f32.mrf.mxu0
    %v213 = vadd.f32 %v154, %v212
    %214 = vmatmul.f32.gmra.mxu0 %v118
    %v215 = vpop.f32.mrf.mxu0
    %v216 = vadd.f32 %v154, %v215
    %217 = vmatmul.f32.gmra.mxu0 %v119
    %v218 = vpop.f32.mrf.mxu0
    %v219 = vadd.f32 %v154, %v218
    %220 = vmatmul.f32.gmra.mxu0 %v120
    %v221 = vpop.f32.mrf.mxu0
    %v222 = vadd.f32 %v154, %v221
    %223 = vmatmul.f32.gmra.mxu0 %v121
    %v224 = vpop.f32.mrf.mxu0
    %v225 = vadd.f32 %v154, %v224
    %226 = vmatmul.f32.gmra.mxu0 %v122
    %v227 = vpop.f32.mrf.mxu0
    %v228 = vadd.f32 %v154, %v227
    %229 = vmatmul.f32.gmra.mxu0 %v123
    %v230 = vpop.f32.mrf.mxu0
    %v231 = vadd.f32 %v154, %v230
    %232 = vmatmul.f32.gmra.mxu0 %v124
    %v233 = vpop.f32.mrf.mxu0
    %v234 = vadd.f32 %v154, %v233
    %235 = vmatmul.f32.gmra.mxu0 %v125
    %v236 = vpop.f32.mrf.mxu0
    %v237 = vadd.f32 %v154, %v236
    %238 = vmatmul.f32.gmra.mxu0 %v126
    %v239 = vpop.f32.mrf.mxu0
    %v240 = vadd.f32 %v154, %v239
    %241 = vmatmul.f32.gmra.mxu0 %v127
    %v242 = vpop.f32.mrf.mxu0
    %v243 = vadd.f32 %v154, %v242
    %244 = vmatmul.f32.gmra.mxu0 %v128
    %v245 = vpop.f32.mrf.mxu0
    %v246 = vadd.f32 %v154, %v245
    %247 = vmatmul.f32.gmra.mxu0 %v129
    %v248 = vpop.f32.mrf.mxu0
    %v249 = vadd.f32 %v154, %v248
    %250 = vmatmul.f32.gmra.mxu0 %v130
    %v251 = vpop.f32.mrf.mxu0
    %v252 = vadd.f32 %v154, %v251
    %253 = vmatmul.f32.gmra.mxu0 %v131
    %v254 = vpop.f32.mrf.mxu0
    %v255 = vadd.f32 %v154, %v254
    %256 = vmatmul.f32.gmra.mxu0 %v132
    %v257 = vpop.f32.mrf.mxu0
    %v258 = vadd.f32 %v154, %v257
    %259 = vmatmul.f32.gmra.mxu0 %v133
    %v260 = vpop.f32.mrf.mxu0
    %v261 = vadd.f32 %v154, %v260
    %262 = vmatmul.f32.gmra.mxu0 %v134
    %v263 = vpop.f32.mrf.mxu0
    %v264 = vadd.f32 %v154, %v263
    %265 = vmatmul.f32.gmra.mxu0 %v135
    %v266 = vpop.f32.mrf.mxu0
    %v267 = vadd.f32 %v154, %v266
    %268 = vdwg.mxu0
    %v269 = vmul.f32 %v174, 0.5
    %v270 = vmul.f32 %v177, 0.5
    %v271 = vmul.f32 %v180, 0.5
    %v272 = vmul.f32 %v183, 0.5
    %v273 = vmul.f32 %v186, 0.5
    %v274 = vmul.f32 %v189, 0.5
    %v275 = vmul.f32 %v192, 0.5
    %v276 = vmul.f32 %v195, 0.5
    %v277 = vmul.f32 %v198, 0.5
    %v278 = vmul.f32 %v201, 0.5
    %v279 = vmul.f32 %v204, 0.5
    %v280 = vmul.f32 %v207, 0.5
    %v281 = vmul.f32 %v210, 0.5
    %v282 = vmul.f32 %v213, 0.5
    %v283 = vmul.f32 %v216, 0.5
    %v284 = vmul.f32 %v219, 0.5
    %v285 = vmul.f32 %v222, 0.5
    %v286 = vmul.f32 %v225, 0.5
    %v287 = vmul.f32 %v228, 0.5
    %v288 = vmul.f32 %v231, 0.5
    %v289 = vmul.f32 %v234, 0.5
    %v290 = vmul.f32 %v237, 0.5
    %v291 = vmul.f32 %v240, 0.5
    %v292 = vmul.f32 %v243, 0.5
    %v293 = vmul.f32 %v246, 0.5
    %v294 = vmul.f32 %v249, 0.5
    %v295 = vmul.f32 %v252, 0.5
    %v296 = vmul.f32 %v255, 0.5
    %v297 = vmul.f32 %v258, 0.5
    %v298 = vmul.f32 %v261, 0.5
    %v299 = vmul.f32 %v264, 0.5
    %v300 = vmul.f32 %v267, 0.5
    %v301 = vmul.f32 %v174, 0.70710677
    %v302 = vmul.f32 %v177, 0.70710677
    %v303 = vmul.f32 %v180, 0.70710677
    %v304 = vmul.f32 %v183, 0.70710677
    %v305 = vmul.f32 %v186, 0.70710677
    %v306 = vmul.f32 %v189, 0.70710677
    %v307 = vmul.f32 %v192, 0.70710677
    %v308 = vmul.f32 %v195, 0.70710677
    %v309 = vmul.f32 %v198, 0.70710677
    %v310 = vmul.f32 %v201, 0.70710677
    %v311 = vmul.f32 %v204, 0.70710677
    %v312 = vmul.f32 %v207, 0.70710677
    %v313 = vmul.f32 %v210, 0.70710677
    %v314 = vmul.f32 %v213, 0.70710677
    %v315 = vmul.f32 %v216, 0.70710677
    %v316 = vmul.f32 %v219, 0.70710677
    %v317 = vmul.f32 %v222, 0.70710677
    %v318 = vmul.f32 %v225, 0.70710677
    %v319 = vmul.f32 %v228, 0.70710677
    %v320 = vmul.f32 %v231, 0.70710677
    %v321 = vmul.f32 %v234, 0.70710677
    %v322 = vmul.f32 %v237, 0.70710677
    %v323 = vmul.f32 %v240, 0.70710677
    %v324 = vmul.f32 %v243, 0.70710677
    %v325 = vmul.f32 %v246, 0.70710677
    %v326 = vmul.f32 %v249, 0.70710677
    %v327 = vmul.f32 %v252, 0.70710677
    %v328 = vmul.f32 %v255, 0.70710677
    %v329 = vmul.f32 %v258, 0.70710677
    %v330 = vmul.f32 %v261, 0.70710677
    %v331 = vmul.f32 %v264, 0.70710677
    %v332 = vmul.f32 %v267, 0.70710677
    %v333 = vand.u32 2147483647, %v301
    %v334 = vand.u32 2147483647, %v302
    %v335 = vand.u32 2147483647, %v303
    %v336 = vand.u32 2147483647, %v304
    %v337 = vand.u32 2147483647, %v305
    %v338 = vand.u32 2147483647, %v306
    %v339 = vand.u32 2147483647, %v307
    %v340 = vand.u32 2147483647, %v308
    %v341 = vand.u32 2147483647, %v309
    %v342 = vand.u32 2147483647, %v310
    %v343 = vand.u32 2147483647, %v311
    %v344 = vand.u32 2147483647, %v312
    %v345 = vand.u32 2147483647, %v313
    %v346 = vand.u32 2147483647, %v314
    %v347 = vand.u32 2147483647, %v315
    %v348 = vand.u32 2147483647, %v316
    %v349 = vand.u32 2147483647, %v317
    %v350 = vand.u32 2147483647, %v318
    %v351 = vand.u32 2147483647, %v319
    %v352 = vand.u32 2147483647, %v320
    %v353 = vand.u32 2147483647, %v321
    %v354 = vand.u32 2147483647, %v322
    %v355 = vand.u32 2147483647, %v323
    %v356 = vand.u32 2147483647, %v324
    %v357 = vand.u32 2147483647, %v325
    %v358 = vand.u32 2147483647, %v326
    %v359 = vand.u32 2147483647, %v327
    %v360 = vand.u32 2147483647, %v328
    %v361 = vand.u32 2147483647, %v329
    %v362 = vand.u32 2147483647, %v330
    %v363 = vand.u32 2147483647, %v331
    %v364 = vand.u32 2147483647, %v332
    %v365 = vmul.f32 %v333, 0.3275911
    %v366 = vmul.f32 %v334, 0.3275911
    %v367 = vmul.f32 %v335, 0.3275911
    %v368 = vmul.f32 %v336, 0.3275911
    %v369 = vmul.f32 %v337, 0.3275911
    %v370 = vmul.f32 %v338, 0.3275911
    %v371 = vmul.f32 %v339, 0.3275911
    %v372 = vmul.f32 %v340, 0.3275911
    %v373 = vmul.f32 %v341, 0.3275911
    %v374 = vmul.f32 %v342, 0.3275911
    %v375 = vmul.f32 %v343, 0.3275911
    %v376 = vmul.f32 %v344, 0.3275911
    %v377 = vmul.f32 %v345, 0.3275911
    %v378 = vmul.f32 %v346, 0.3275911
    %v379 = vmul.f32 %v347, 0.3275911
    %v380 = vmul.f32 %v348, 0.3275911
    %v381 = vmul.f32 %v349, 0.3275911
    %v382 = vmul.f32 %v350, 0.3275911
    %v383 = vmul.f32 %v351, 0.3275911
    %v384 = vmul.f32 %v352, 0.3275911
    %v385 = vmul.f32 %v353, 0.3275911
    %v386 = vmul.f32 %v354, 0.3275911
    %v387 = vmul.f32 %v355, 0.3275911
    %v388 = vmul.f32 %v356, 0.3275911
    %v389 = vmul.f32 %v357, 0.3275911
    %v390 = vmul.f32 %v358, 0.3275911
    %v391 = vmul.f32 %v359, 0.3275911
    %v392 = vmul.f32 %v360, 0.3275911
    %v393 = vmul.f32 %v361, 0.3275911
    %v394 = vmul.f32 %v362, 0.3275911
    %v395 = vmul.f32 %v363, 0.3275911
    %v396 = vmul.f32 %v364, 0.3275911
    %v397 = vadd.f32 %v365, 1.0
    %v398 = vadd.f32 %v366, 1.0
    %v399 = vadd.f32 %v367, 1.0
    %v400 = vadd.f32 %v368, 1.0
    %v401 = vadd.f32 %v369, 1.0
    %v402 = vadd.f32 %v370, 1.0
    %v403 = vadd.f32 %v371, 1.0
    %v404 = vadd.f32 %v372, 1.0
    %v405 = vadd.f32 %v373, 1.0
    %v406 = vadd.f32 %v374, 1.0
    %v407 = vadd.f32 %v375, 1.0
    %v408 = vadd.f32 %v376, 1.0
    %v409 = vadd.f32 %v377, 1.0
    %v410 = vadd.f32 %v378, 1.0
    %v411 = vadd.f32 %v379, 1.0
    %v412 = vadd.f32 %v380, 1.0
    %v413 = vadd.f32 %v381, 1.0
    %v414 = vadd.f32 %v382, 1.0
    %v415 = vadd.f32 %v383, 1.0
    %v416 = vadd.f32 %v384, 1.0
    %v417 = vadd.f32 %v385, 1.0
    %v418 = vadd.f32 %v386, 1.0
    %v419 = vadd.f32 %v387, 1.0
    %v420 = vadd.f32 %v388, 1.0
    %v421 = vadd.f32 %v389, 1.0
    %v422 = vadd.f32 %v390, 1.0
    %v423 = vadd.f32 %v391, 1.0
    %v424 = vadd.f32 %v392, 1.0
    %v425 = vadd.f32 %v393, 1.0
    %v426 = vadd.f32 %v394, 1.0
    %v427 = vadd.f32 %v395, 1.0
    %v428 = vadd.f32 %v396, 1.0
    %v429 = vrcp.pop %v397
    %v430 = vmul.f32 %v397, %v429
    %v431 = vsub.f32 1.0, %v430
    %v432 = vmul.f32 %v429, %v431
    %v433 = vadd.f32 %v429, %v432
    %vm434 = vweird.f32 %v397
    %vm435 = vweird.f32 %v429
    %vm436 = vmor %vm434, %vm435
    %v437 = vsel %vm436, %v429, %v433
    %v438 = vand.u32 2147483647, %v397
    %vm439 = vcmp.eq.f32.partialorder %v438, 8.507059e+37
    %v440 = vand.u32 %v397, 2147483648
    %v441 = vor.u32 1.1754944e-38, %v440
    %v442 = vsel %vm439, %v441, %v437
    %v443 = vmul.f32 1.0, %v442
    %v444 = vrcp.pop %v398
    %v445 = vmul.f32 %v398, %v444
    %v446 = vsub.f32 1.0, %v445
    %v447 = vmul.f32 %v444, %v446
    %v448 = vadd.f32 %v444, %v447
    %vm449 = vweird.f32 %v398
    %vm450 = vweird.f32 %v444
    %vm451 = vmor %vm449, %vm450
    %v452 = vsel %vm451, %v444, %v448
    %v453 = vand.u32 2147483647, %v398
    %vm454 = vcmp.eq.f32.partialorder %v453, 8.507059e+37
    %v455 = vand.u32 %v398, 2147483648
    %v456 = vor.u32 1.1754944e-38, %v455
    %v457 = vsel %vm454, %v456, %v452
    %v458 = vmul.f32 1.0, %v457
    %v459 = vrcp.pop %v399
    %v460 = vmul.f32 %v399, %v459
    %v461 = vsub.f32 1.0, %v460
    %v462 = vmul.f32 %v459, %v461
    %v463 = vadd.f32 %v459, %v462
    %vm464 = vweird.f32 %v399
    %vm465 = vweird.f32 %v459
    %vm466 = vmor %vm464, %vm465
    %v467 = vsel %vm466, %v459, %v463
    %v468 = vand.u32 2147483647, %v399
    %vm469 = vcmp.eq.f32.partialorder %v468, 8.507059e+37
    %v470 = vand.u32 %v399, 2147483648
    %v471 = vor.u32 1.1754944e-38, %v470
    %v472 = vsel %vm469, %v471, %v467
    %v473 = vmul.f32 1.0, %v472
    %v474 = vrcp.pop %v400
    %v475 = vmul.f32 %v400, %v474
    %v476 = vsub.f32 1.0, %v475
    %v477 = vmul.f32 %v474, %v476
    %v478 = vadd.f32 %v474, %v477
    %vm479 = vweird.f32 %v400
    %vm480 = vweird.f32 %v474
    %vm481 = vmor %vm479, %vm480
    %v482 = vsel %vm481, %v474, %v478
    %v483 = vand.u32 2147483647, %v400
    %vm484 = vcmp.eq.f32.partialorder %v483, 8.507059e+37
    %v485 = vand.u32 %v400, 2147483648
    %v486 = vor.u32 1.1754944e-38, %v485
    %v487 = vsel %vm484, %v486, %v482
    %v488 = vmul.f32 1.0, %v487
    %v489 = vrcp.pop %v401
    %v490 = vmul.f32 %v401, %v489
    %v491 = vsub.f32 1.0, %v490
    %v492 = vmul.f32 %v489, %v491
    %v493 = vadd.f32 %v489, %v492
    %vm494 = vweird.f32 %v401
    %vm495 = vweird.f32 %v489
    %vm496 = vmor %vm494, %vm495
    %v497 = vsel %vm496, %v489, %v493
    %v498 = vand.u32 2147483647, %v401
    %vm499 = vcmp.eq.f32.partialorder %v498, 8.507059e+37
    %v500 = vand.u32 %v401, 2147483648
    %v501 = vor.u32 1.1754944e-38, %v500
    %v502 = vsel %vm499, %v501, %v497
    %v503 = vmul.f32 1.0, %v502
    %v504 = vrcp.pop %v402
    %v505 = vmul.f32 %v402, %v504
    %v506 = vsub.f32 1.0, %v505
    %v507 = vmul.f32 %v504, %v506
    %v508 = vadd.f32 %v504, %v507
    %vm509 = vweird.f32 %v402
    %vm510 = vweird.f32 %v504
    %vm511 = vmor %vm509, %vm510
    %v512 = vsel %vm511, %v504, %v508
    %v513 = vand.u32 2147483647, %v402
    %vm514 = vcmp.eq.f32.partialorder %v513, 8.507059e+37
    %v515 = vand.u32 %v402, 2147483648
    %v516 = vor.u32 1.1754944e-38, %v515
    %v517 = vsel %vm514, %v516, %v512
    %v518 = vmul.f32 1.0, %v517
    %v519 = vrcp.pop %v403
    %v520 = vmul.f32 %v403, %v519
    %v521 = vsub.f32 1.0, %v520
    %v522 = vmul.f32 %v519, %v521
    %v523 = vadd.f32 %v519, %v522
    %vm524 = vweird.f32 %v403
    %vm525 = vweird.f32 %v519
    %vm526 = vmor %vm524, %vm525
    %v527 = vsel %vm526, %v519, %v523
    %v528 = vand.u32 2147483647, %v403
    %vm529 = vcmp.eq.f32.partialorder %v528, 8.507059e+37
    %v530 = vand.u32 %v403, 2147483648
    %v531 = vor.u32 1.1754944e-38, %v530
    %v532 = vsel %vm529, %v531, %v527
    %v533 = vmul.f32 1.0, %v532
    %v534 = vrcp.pop %v404
    %v535 = vmul.f32 %v404, %v534
    %v536 = vsub.f32 1.0, %v535
    %v537 = vmul.f32 %v534, %v536
    %v538 = vadd.f32 %v534, %v537
    %vm539 = vweird.f32 %v404
    %vm540 = vweird.f32 %v534
    %vm541 = vmor %vm539, %vm540
    %v542 = vsel %vm541, %v534, %v538
    %v543 = vand.u32 2147483647, %v404
    %vm544 = vcmp.eq.f32.partialorder %v543, 8.507059e+37
    %v545 = vand.u32 %v404, 2147483648
    %v546 = vor.u32 1.1754944e-38, %v545
    %v547 = vsel %vm544, %v546, %v542
    %v548 = vmul.f32 1.0, %v547
    %v549 = vrcp.pop %v405
    %v550 = vmul.f32 %v405, %v549
    %v551 = vsub.f32 1.0, %v550
    %v552 = vmul.f32 %v549, %v551
    %v553 = vadd.f32 %v549, %v552
    %vm554 = vweird.f32 %v405
    %vm555 = vweird.f32 %v549
    %vm556 = vmor %vm554, %vm555
    %v557 = vsel %vm556, %v549, %v553
    %v558 = vand.u32 2147483647, %v405
    %vm559 = vcmp.eq.f32.partialorder %v558, 8.507059e+37
    %v560 = vand.u32 %v405, 2147483648
    %v561 = vor.u32 1.1754944e-38, %v560
    %v562 = vsel %vm559, %v561, %v557
    %v563 = vmul.f32 1.0, %v562
    %v564 = vrcp.pop %v406
    %v565 = vmul.f32 %v406, %v564
    %v566 = vsub.f32 1.0, %v565
    %v567 = vmul.f32 %v564, %v566
    %v568 = vadd.f32 %v564, %v567
    %vm569 = vweird.f32 %v406
    %vm570 = vweird.f32 %v564
    %vm571 = vmor %vm569, %vm570
    %v572 = vsel %vm571, %v564, %v568
    %v573 = vand.u32 2147483647, %v406
    %vm574 = vcmp.eq.f32.partialorder %v573, 8.507059e+37
    %v575 = vand.u32 %v406, 2147483648
    %v576 = vor.u32 1.1754944e-38, %v575
    %v577 = vsel %vm574, %v576, %v572
    %v578 = vmul.f32 1.0, %v577
    %v579 = vrcp.pop %v407
    %v580 = vmul.f32 %v407, %v579
    %v581 = vsub.f32 1.0, %v580
    %v582 = vmul.f32 %v579, %v581
    %v583 = vadd.f32 %v579, %v582
    %vm584 = vweird.f32 %v407
    %vm585 = vweird.f32 %v579
    %vm586 = vmor %vm584, %vm585
    %v587 = vsel %vm586, %v579, %v583
    %v588 = vand.u32 2147483647, %v407
    %vm589 = vcmp.eq.f32.partialorder %v588, 8.507059e+37
    %v590 = vand.u32 %v407, 2147483648
    %v591 = vor.u32 1.1754944e-38, %v590
    %v592 = vsel %vm589, %v591, %v587
    %v593 = vmul.f32 1.0, %v592
    %v594 = vrcp.pop %v408
    %v595 = vmul.f32 %v408, %v594
    %v596 = vsub.f32 1.0, %v595
    %v597 = vmul.f32 %v594, %v596
    %v598 = vadd.f32 %v594, %v597
    %vm599 = vweird.f32 %v408
    %vm600 = vweird.f32 %v594
    %vm601 = vmor %vm599, %vm600
    %v602 = vsel %vm601, %v594, %v598
    %v603 = vand.u32 2147483647, %v408
    %vm604 = vcmp.eq.f32.partialorder %v603, 8.507059e+37
    %v605 = vand.u32 %v408, 2147483648
    %v606 = vor.u32 1.1754944e-38, %v605
    %v607 = vsel %vm604, %v606, %v602
    %v608 = vmul.f32 1.0, %v607
    %v609 = vrcp.pop %v409
    %v610 = vmul.f32 %v409, %v609
    %v611 = vsub.f32 1.0, %v610
    %v612 = vmul.f32 %v609, %v611
    %v613 = vadd.f32 %v609, %v612
    %vm614 = vweird.f32 %v409
    %vm615 = vweird.f32 %v609
    %vm616 = vmor %vm614, %vm615
    %v617 = vsel %vm616, %v609, %v613
    %v618 = vand.u32 2147483647, %v409
    %vm619 = vcmp.eq.f32.partialorder %v618, 8.507059e+37
    %v620 = vand.u32 %v409, 2147483648
    %v621 = vor.u32 1.1754944e-38, %v620
    %v622 = vsel %vm619, %v621, %v617
    %v623 = vmul.f32 1.0, %v622
    %v624 = vrcp.pop %v410
    %v625 = vmul.f32 %v410, %v624
    %v626 = vsub.f32 1.0, %v625
    %v627 = vmul.f32 %v624, %v626
    %v628 = vadd.f32 %v624, %v627
    %vm629 = vweird.f32 %v410
    %vm630 = vweird.f32 %v624
    %vm631 = vmor %vm629, %vm630
    %v632 = vsel %vm631, %v624, %v628
    %v633 = vand.u32 2147483647, %v410
    %vm634 = vcmp.eq.f32.partialorder %v633, 8.507059e+37
    %v635 = vand.u32 %v410, 2147483648
    %v636 = vor.u32 1.1754944e-38, %v635
    %v637 = vsel %vm634, %v636, %v632
    %v638 = vmul.f32 1.0, %v637
    %v639 = vrcp.pop %v411
    %v640 = vmul.f32 %v411, %v639
    %v641 = vsub.f32 1.0, %v640
    %v642 = vmul.f32 %v639, %v641
    %v643 = vadd.f32 %v639, %v642
    %vm644 = vweird.f32 %v411
    %vm645 = vweird.f32 %v639
    %vm646 = vmor %vm644, %vm645
    %v647 = vsel %vm646, %v639, %v643
    %v648 = vand.u32 2147483647, %v411
    %vm649 = vcmp.eq.f32.partialorder %v648, 8.507059e+37
    %v650 = vand.u32 %v411, 2147483648
    %v651 = vor.u32 1.1754944e-38, %v650
    %v652 = vsel %vm649, %v651, %v647
    %v653 = vmul.f32 1.0, %v652
    %v654 = vrcp.pop %v412
    %v655 = vmul.f32 %v412, %v654
    %v656 = vsub.f32 1.0, %v655
    %v657 = vmul.f32 %v654, %v656
    %v658 = vadd.f32 %v654, %v657
    %vm659 = vweird.f32 %v412
    %vm660 = vweird.f32 %v654
    %vm661 = vmor %vm659, %vm660
    %v662 = vsel %vm661, %v654, %v658
    %v663 = vand.u32 2147483647, %v412
    %vm664 = vcmp.eq.f32.partialorder %v663, 8.507059e+37
    %v665 = vand.u32 %v412, 2147483648
    %v666 = vor.u32 1.1754944e-38, %v665
    %v667 = vsel %vm664, %v666, %v662
    %v668 = vmul.f32 1.0, %v667
    %v669 = vrcp.pop %v413
    %v670 = vmul.f32 %v413, %v669
    %v671 = vsub.f32 1.0, %v670
    %v672 = vmul.f32 %v669, %v671
    %v673 = vadd.f32 %v669, %v672
    %vm674 = vweird.f32 %v413
    %vm675 = vweird.f32 %v669
    %vm676 = vmor %vm674, %vm675
    %v677 = vsel %vm676, %v669, %v673
    %v678 = vand.u32 2147483647, %v413
    %vm679 = vcmp.eq.f32.partialorder %v678, 8.507059e+37
    %v680 = vand.u32 %v413, 2147483648
    %v681 = vor.u32 1.1754944e-38, %v680
    %v682 = vsel %vm679, %v681, %v677
    %v683 = vmul.f32 1.0, %v682
    %v684 = vrcp.pop %v414
    %v685 = vmul.f32 %v414, %v684
    %v686 = vsub.f32 1.0, %v685
    %v687 = vmul.f32 %v684, %v686
    %v688 = vadd.f32 %v684, %v687
    %vm689 = vweird.f32 %v414
    %vm690 = vweird.f32 %v684
    %vm691 = vmor %vm689, %vm690
    %v692 = vsel %vm691, %v684, %v688
    %v693 = vand.u32 2147483647, %v414
    %vm694 = vcmp.eq.f32.partialorder %v693, 8.507059e+37
    %v695 = vand.u32 %v414, 2147483648
    %v696 = vor.u32 1.1754944e-38, %v695
    %v697 = vsel %vm694, %v696, %v692
    %v698 = vmul.f32 1.0, %v697
    %v699 = vrcp.pop %v415
    %v700 = vmul.f32 %v415, %v699
    %v701 = vsub.f32 1.0, %v700
    %v702 = vmul.f32 %v699, %v701
    %v703 = vadd.f32 %v699, %v702
    %vm704 = vweird.f32 %v415
    %vm705 = vweird.f32 %v699
    %vm706 = vmor %vm704, %vm705
    %v707 = vsel %vm706, %v699, %v703
    %v708 = vand.u32 2147483647, %v415
    %vm709 = vcmp.eq.f32.partialorder %v708, 8.507059e+37
    %v710 = vand.u32 %v415, 2147483648
    %v711 = vor.u32 1.1754944e-38, %v710
    %v712 = vsel %vm709, %v711, %v707
    %v713 = vmul.f32 1.0, %v712
    %v714 = vrcp.pop %v416
    %v715 = vmul.f32 %v416, %v714
    %v716 = vsub.f32 1.0, %v715
    %v717 = vmul.f32 %v714, %v716
    %v718 = vadd.f32 %v714, %v717
    %vm719 = vweird.f32 %v416
    %vm720 = vweird.f32 %v714
    %vm721 = vmor %vm719, %vm720
    %v722 = vsel %vm721, %v714, %v718
    %v723 = vand.u32 2147483647, %v416
    %vm724 = vcmp.eq.f32.partialorder %v723, 8.507059e+37
    %v725 = vand.u32 %v416, 2147483648
    %v726 = vor.u32 1.1754944e-38, %v725
    %v727 = vsel %vm724, %v726, %v722
    %v728 = vmul.f32 1.0, %v727
    %v729 = vrcp.pop %v417
    %v730 = vmul.f32 %v417, %v729
    %v731 = vsub.f32 1.0, %v730
    %v732 = vmul.f32 %v729, %v731
    %v733 = vadd.f32 %v729, %v732
    %vm734 = vweird.f32 %v417
    %vm735 = vweird.f32 %v729
    %vm736 = vmor %vm734, %vm735
    %v737 = vsel %vm736, %v729, %v733
    %v738 = vand.u32 2147483647, %v417
    %vm739 = vcmp.eq.f32.partialorder %v738, 8.507059e+37
    %v740 = vand.u32 %v417, 2147483648
    %v741 = vor.u32 1.1754944e-38, %v740
    %v742 = vsel %vm739, %v741, %v737
    %v743 = vmul.f32 1.0, %v742
    %v744 = vrcp.pop %v418
    %v745 = vmul.f32 %v418, %v744
    %v746 = vsub.f32 1.0, %v745
    %v747 = vmul.f32 %v744, %v746
    %v748 = vadd.f32 %v744, %v747
    %vm749 = vweird.f32 %v418
    %vm750 = vweird.f32 %v744
    %vm751 = vmor %vm749, %vm750
    %v752 = vsel %vm751, %v744, %v748
    %v753 = vand.u32 2147483647, %v418
    %vm754 = vcmp.eq.f32.partialorder %v753, 8.507059e+37
    %v755 = vand.u32 %v418, 2147483648
    %v756 = vor.u32 1.1754944e-38, %v755
    %v757 = vsel %vm754, %v756, %v752
    %v758 = vmul.f32 1.0, %v757
    %v759 = vrcp.pop %v419
    %v760 = vmul.f32 %v419, %v759
    %v761 = vsub.f32 1.0, %v760
    %v762 = vmul.f32 %v759, %v761
    %v763 = vadd.f32 %v759, %v762
    %vm764 = vweird.f32 %v419
    %vm765 = vweird.f32 %v759
    %vm766 = vmor %vm764, %vm765
    %v767 = vsel %vm766, %v759, %v763
    %v768 = vand.u32 2147483647, %v419
    %vm769 = vcmp.eq.f32.partialorder %v768, 8.507059e+37
    %v770 = vand.u32 %v419, 2147483648
    %v771 = vor.u32 1.1754944e-38, %v770
    %v772 = vsel %vm769, %v771, %v767
    %v773 = vmul.f32 1.0, %v772
    %v774 = vrcp.pop %v420
    %v775 = vmul.f32 %v420, %v774
    %v776 = vsub.f32 1.0, %v775
    %v777 = vmul.f32 %v774, %v776
    %v778 = vadd.f32 %v774, %v777
    %vm779 = vweird.f32 %v420
    %vm780 = vweird.f32 %v774
    %vm781 = vmor %vm779, %vm780
    %v782 = vsel %vm781, %v774, %v778
    %v783 = vand.u32 2147483647, %v420
    %vm784 = vcmp.eq.f32.partialorder %v783, 8.507059e+37
    %v785 = vand.u32 %v420, 2147483648
    %v786 = vor.u32 1.1754944e-38, %v785
    %v787 = vsel %vm784, %v786, %v782
    %v788 = vmul.f32 1.0, %v787
    %v789 = vrcp.pop %v421
    %v790 = vmul.f32 %v421, %v789
    %v791 = vsub.f32 1.0, %v790
    %v792 = vmul.f32 %v789, %v791
    %v793 = vadd.f32 %v789, %v792
    %vm794 = vweird.f32 %v421
    %vm795 = vweird.f32 %v789
    %vm796 = vmor %vm794, %vm795
    %v797 = vsel %vm796, %v789, %v793
    %v798 = vand.u32 2147483647, %v421
    %vm799 = vcmp.eq.f32.partialorder %v798, 8.507059e+37
    %v800 = vand.u32 %v421, 2147483648
    %v801 = vor.u32 1.1754944e-38, %v800
    %v802 = vsel %vm799, %v801, %v797
    %v803 = vmul.f32 1.0, %v802
    %v804 = vrcp.pop %v422
    %v805 = vmul.f32 %v422, %v804
    %v806 = vsub.f32 1.0, %v805
    %v807 = vmul.f32 %v804, %v806
    %v808 = vadd.f32 %v804, %v807
    %vm809 = vweird.f32 %v422
    %vm810 = vweird.f32 %v804
    %vm811 = vmor %vm809, %vm810
    %v812 = vsel %vm811, %v804, %v808
    %v813 = vand.u32 2147483647, %v422
    %vm814 = vcmp.eq.f32.partialorder %v813, 8.507059e+37
    %v815 = vand.u32 %v422, 2147483648
    %v816 = vor.u32 1.1754944e-38, %v815
    %v817 = vsel %vm814, %v816, %v812
    %v818 = vmul.f32 1.0, %v817
    %v819 = vrcp.pop %v423
    %v820 = vmul.f32 %v423, %v819
    %v821 = vsub.f32 1.0, %v820
    %v822 = vmul.f32 %v819, %v821
    %v823 = vadd.f32 %v819, %v822
    %vm824 = vweird.f32 %v423
    %vm825 = vweird.f32 %v819
    %vm826 = vmor %vm824, %vm825
    %v827 = vsel %vm826, %v819, %v823
    %v828 = vand.u32 2147483647, %v423
    %vm829 = vcmp.eq.f32.partialorder %v828, 8.507059e+37
    %v830 = vand.u32 %v423, 2147483648
    %v831 = vor.u32 1.1754944e-38, %v830
    %v832 = vsel %vm829, %v831, %v827
    %v833 = vmul.f32 1.0, %v832
    %v834 = vrcp.pop %v424
    %v835 = vmul.f32 %v424, %v834
    %v836 = vsub.f32 1.0, %v835
    %v837 = vmul.f32 %v834, %v836
    %v838 = vadd.f32 %v834, %v837
    %vm839 = vweird.f32 %v424
    %vm840 = vweird.f32 %v834
    %vm841 = vmor %vm839, %vm840
    %v842 = vsel %vm841, %v834, %v838
    %v843 = vand.u32 2147483647, %v424
    %vm844 = vcmp.eq.f32.partialorder %v843, 8.507059e+37
    %v845 = vand.u32 %v424, 2147483648
    %v846 = vor.u32 1.1754944e-38, %v845
    %v847 = vsel %vm844, %v846, %v842
    %v848 = vmul.f32 1.0, %v847
    %v849 = vrcp.pop %v425
    %v850 = vmul.f32 %v425, %v849
    %v851 = vsub.f32 1.0, %v850
    %v852 = vmul.f32 %v849, %v851
    %v853 = vadd.f32 %v849, %v852
    %vm854 = vweird.f32 %v425
    %vm855 = vweird.f32 %v849
    %vm856 = vmor %vm854, %vm855
    %v857 = vsel %vm856, %v849, %v853
    %v858 = vand.u32 2147483647, %v425
    %vm859 = vcmp.eq.f32.partialorder %v858, 8.507059e+37
    %v860 = vand.u32 %v425, 2147483648
    %v861 = vor.u32 1.1754944e-38, %v860
    %v862 = vsel %vm859, %v861, %v857
    %v863 = vmul.f32 1.0, %v862
    %v864 = vrcp.pop %v426
    %v865 = vmul.f32 %v426, %v864
    %v866 = vsub.f32 1.0, %v865
    %v867 = vmul.f32 %v864, %v866
    %v868 = vadd.f32 %v864, %v867
    %vm869 = vweird.f32 %v426
    %vm870 = vweird.f32 %v864
    %vm871 = vmor %vm869, %vm870
    %v872 = vsel %vm871, %v864, %v868
    %v873 = vand.u32 2147483647, %v426
    %vm874 = vcmp.eq.f32.partialorder %v873, 8.507059e+37
    %v875 = vand.u32 %v426, 2147483648
    %v876 = vor.u32 1.1754944e-38, %v875
    %v877 = vsel %vm874, %v876, %v872
    %v878 = vmul.f32 1.0, %v877
    %v879 = vrcp.pop %v427
    %v880 = vmul.f32 %v427, %v879
    %v881 = vsub.f32 1.0, %v880
    %v882 = vmul.f32 %v879, %v881
    %v883 = vadd.f32 %v879, %v882
    %vm884 = vweird.f32 %v427
    %vm885 = vweird.f32 %v879
    %vm886 = vmor %vm884, %vm885
    %v887 = vsel %vm886, %v879, %v883
    %v888 = vand.u32 2147483647, %v427
    %vm889 = vcmp.eq.f32.partialorder %v888, 8.507059e+37
    %v890 = vand.u32 %v427, 2147483648
    %v891 = vor.u32 1.1754944e-38, %v890
    %v892 = vsel %vm889, %v891, %v887
    %v893 = vmul.f32 1.0, %v892
    %v894 = vrcp.pop %v428
    %v895 = vmul.f32 %v428, %v894
    %v896 = vsub.f32 1.0, %v895
    %v897 = vmul.f32 %v894, %v896
    %v898 = vadd.f32 %v894, %v897
    %vm899 = vweird.f32 %v428
    %vm900 = vweird.f32 %v894
    %vm901 = vmor %vm899, %vm900
    %v902 = vsel %vm901, %v894, %v898
    %v903 = vand.u32 2147483647, %v428
    %vm904 = vcmp.eq.f32.partialorder %v903, 8.507059e+37
    %v905 = vand.u32 %v428, 2147483648
    %v906 = vor.u32 1.1754944e-38, %v905
    %v907 = vsel %vm904, %v906, %v902
    %v908 = vmul.f32 1.0, %v907
    %v909 = vmul.f32 %v443, 1.0614054
    %v910 = vmul.f32 %v458, 1.0614054
    %v911 = vmul.f32 %v473, 1.0614054
    %v912 = vmul.f32 %v488, 1.0614054
    %v913 = vmul.f32 %v503, 1.0614054
    %v914 = vmul.f32 %v518, 1.0614054
    %v915 = vmul.f32 %v533, 1.0614054
    %v916 = vmul.f32 %v548, 1.0614054
    %v917 = vmul.f32 %v563, 1.0614054
    %v918 = vmul.f32 %v578, 1.0614054
    %v919 = vmul.f32 %v593, 1.0614054
    %v920 = vmul.f32 %v608, 1.0614054
    %v921 = vmul.f32 %v623, 1.0614054
    %v922 = vmul.f32 %v638, 1.0614054
    %v923 = vmul.f32 %v653, 1.0614054
    %v924 = vmul.f32 %v668, 1.0614054
    %v925 = vmul.f32 %v683, 1.0614054
    %v926 = vmul.f32 %v698, 1.0614054
    %v927 = vmul.f32 %v713, 1.0614054
    %v928 = vmul.f32 %v728, 1.0614054
    %v929 = vmul.f32 %v743, 1.0614054
    %v930 = vmul.f32 %v758, 1.0614054
    %v931 = vmul.f32 %v773, 1.0614054
    %v932 = vmul.f32 %v788, 1.0614054
    %v933 = vmul.f32 %v803, 1.0614054
    %v934 = vmul.f32 %v818, 1.0614054
    %v935 = vmul.f32 %v833, 1.0614054
    %v936 = vmul.f32 %v848, 1.0614054
    %v937 = vmul.f32 %v863, 1.0614054
    %v938 = vmul.f32 %v878, 1.0614054
    %v939 = vmul.f32 %v893, 1.0614054
    %v940 = vmul.f32 %v908, 1.0614054
    %v941 = vadd.f32 %v909, -1.4531521
    %v942 = vadd.f32 %v910, -1.4531521
    %v943 = vadd.f32 %v911, -1.4531521
    %v944 = vadd.f32 %v912, -1.4531521
    %v945 = vadd.f32 %v913, -1.4531521
    %v946 = vadd.f32 %v914, -1.4531521
    %v947 = vadd.f32 %v915, -1.4531521
    %v948 = vadd.f32 %v916, -1.4531521
    %v949 = vadd.f32 %v917, -1.4531521
    %v950 = vadd.f32 %v918, -1.4531521
    %v951 = vadd.f32 %v919, -1.4531521
    %v952 = vadd.f32 %v920, -1.4531521
    %v953 = vadd.f32 %v921, -1.4531521
    %v954 = vadd.f32 %v922, -1.4531521
    %v955 = vadd.f32 %v923, -1.4531521
    %v956 = vadd.f32 %v924, -1.4531521
    %v957 = vadd.f32 %v925, -1.4531521
    %v958 = vadd.f32 %v926, -1.4531521
    %v959 = vadd.f32 %v927, -1.4531521
    %v960 = vadd.f32 %v928, -1.4531521
    %v961 = vadd.f32 %v929, -1.4531521
    %v962 = vadd.f32 %v930, -1.4531521
    %v963 = vadd.f32 %v931, -1.4531521
    %v964 = vadd.f32 %v932, -1.4531521
    %v965 = vadd.f32 %v933, -1.4531521
    %v966 = vadd.f32 %v934, -1.4531521
    %v967 = vadd.f32 %v935, -1.4531521
    %v968 = vadd.f32 %v936, -1.4531521
    %v969 = vadd.f32 %v937, -1.4531521
    %v970 = vadd.f32 %v938, -1.4531521
    %v971 = vadd.f32 %v939, -1.4531521
    %v972 = vadd.f32 %v940, -1.4531521
    %v973 = vmul.f32 %v941, %v443
    %v974 = vmul.f32 %v942, %v458
    %v975 = vmul.f32 %v943, %v473
    %v976 = vmul.f32 %v944, %v488
    %v977 = vmul.f32 %v945, %v503
    %v978 = vmul.f32 %v946, %v518
    %v979 = vmul.f32 %v947, %v533
    %v980 = vmul.f32 %v948, %v548
    %v981 = vmul.f32 %v949, %v563
    %v982 = vmul.f32 %v950, %v578
    %v983 = vmul.f32 %v951, %v593
    %v984 = vmul.f32 %v952, %v608
    %v985 = vmul.f32 %v953, %v623
    %v986 = vmul.f32 %v954, %v638
    %v987 = vmul.f32 %v955, %v653
    %v988 = vmul.f32 %v956, %v668
    %v989 = vmul.f32 %v957, %v683
    %v990 = vmul.f32 %v958, %v698
    %v991 = vmul.f32 %v959, %v713
    %v992 = vmul.f32 %v960, %v728
    %v993 = vmul.f32 %v961, %v743
    %v994 = vmul.f32 %v962, %v758
    %v995 = vmul.f32 %v963, %v773
    %v996 = vmul.f32 %v964, %v788
    %v997 = vmul.f32 %v965, %v803
    %v998 = vmul.f32 %v966, %v818
    %v999 = vmul.f32 %v967, %v833
    %v1000 = vmul.f32 %v968, %v848
    %v1001 = vmul.f32 %v969, %v863
    %v1002 = vmul.f32 %v970, %v878
    %v1003 = vmul.f32 %v971, %v893
    %v1004 = vmul.f32 %v972, %v908
    %v1005 = vadd.f32 %v973, 1.4214138
    %v1006 = vadd.f32 %v974, 1.4214138
    %v1007 = vadd.f32 %v975, 1.4214138
    %v1008 = vadd.f32 %v976, 1.4214138
    %v1009 = vadd.f32 %v977, 1.4214138
    %v1010 = vadd.f32 %v978, 1.4214138
    %v1011 = vadd.f32 %v979, 1.4214138
    %v1012 = vadd.f32 %v980, 1.4214138
    %v1013 = vadd.f32 %v981, 1.4214138
    %v1014 = vadd.f32 %v982, 1.4214138
    %v1015 = vadd.f32 %v983, 1.4214138
    %v1016 = vadd.f32 %v984, 1.4214138
    %v1017 = vadd.f32 %v985, 1.4214138
    %v1018 = vadd.f32 %v986, 1.4214138
    %v1019 = vadd.f32 %v987, 1.4214138
    %v1020 = vadd.f32 %v988, 1.4214138
    %v1021 = vadd.f32 %v989, 1.4214138
    %v1022 = vadd.f32 %v990, 1.4214138
    %v1023 = vadd.f32 %v991, 1.4214138
    %v1024 = vadd.f32 %v992, 1.4214138
    %v1025 = vadd.f32 %v993, 1.4214138
    %v1026 = vadd.f32 %v994, 1.4214138
    %v1027 = vadd.f32 %v995, 1.4214138
    %v1028 = vadd.f32 %v996, 1.4214138
    %v1029 = vadd.f32 %v997, 1.4214138
    %v1030 = vadd.f32 %v998, 1.4214138
    %v1031 = vadd.f32 %v999, 1.4214138
    %v1032 = vadd.f32 %v1000, 1.4214138
    %v1033 = vadd.f32 %v1001, 1.4214138
    %v1034 = vadd.f32 %v1002, 1.4214138
    %v1035 = vadd.f32 %v1003, 1.4214138
    %v1036 = vadd.f32 %v1004, 1.4214138
    %v1037 = vmul.f32 %v1005, %v443
    %v1038 = vmul.f32 %v1006, %v458
    %v1039 = vmul.f32 %v1007, %v473
    %v1040 = vmul.f32 %v1008, %v488
    %v1041 = vmul.f32 %v1009, %v503
    %v1042 = vmul.f32 %v1010, %v518
    %v1043 = vmul.f32 %v1011, %v533
    %v1044 = vmul.f32 %v1012, %v548
    %v1045 = vmul.f32 %v1013, %v563
    %v1046 = vmul.f32 %v1014, %v578
    %v1047 = vmul.f32 %v1015, %v593
    %v1048 = vmul.f32 %v1016, %v608
    %v1049 = vmul.f32 %v1017, %v623
    %v1050 = vmul.f32 %v1018, %v638
    %v1051 = vmul.f32 %v1019, %v653
    %v1052 = vmul.f32 %v1020, %v668
    %v1053 = vmul.f32 %v1021, %v683
    %v1054 = vmul.f32 %v1022, %v698
    %v1055 = vmul.f32 %v1023, %v713
    %v1056 = vmul.f32 %v1024, %v728
    %v1057 = vmul.f32 %v1025, %v743
    %v1058 = vmul.f32 %v1026, %v758
    %v1059 = vmul.f32 %v1027, %v773
    %v1060 = vmul.f32 %v1028, %v788
    %v1061 = vmul.f32 %v1029, %v803
    %v1062 = vmul.f32 %v1030, %v818
    %v1063 = vmul.f32 %v1031, %v833
    %v1064 = vmul.f32 %v1032, %v848
    %v1065 = vmul.f32 %v1033, %v863
    %v1066 = vmul.f32 %v1034, %v878
    %v1067 = vmul.f32 %v1035, %v893
    %v1068 = vmul.f32 %v1036, %v908
    %v1069 = vadd.f32 %v1037, -0.28449672
    %v1070 = vadd.f32 %v1038, -0.28449672
    %v1071 = vadd.f32 %v1039, -0.28449672
    %v1072 = vadd.f32 %v1040, -0.28449672
    %v1073 = vadd.f32 %v1041, -0.28449672
    %v1074 = vadd.f32 %v1042, -0.28449672
    %v1075 = vadd.f32 %v1043, -0.28449672
    %v1076 = vadd.f32 %v1044, -0.28449672
    %v1077 = vadd.f32 %v1045, -0.28449672
    %v1078 = vadd.f32 %v1046, -0.28449672
    %v1079 = vadd.f32 %v1047, -0.28449672
    %v1080 = vadd.f32 %v1048, -0.28449672
    %v1081 = vadd.f32 %v1049, -0.28449672
    %v1082 = vadd.f32 %v1050, -0.28449672
    %v1083 = vadd.f32 %v1051, -0.28449672
    %v1084 = vadd.f32 %v1052, -0.28449672
    %v1085 = vadd.f32 %v1053, -0.28449672
    %v1086 = vadd.f32 %v1054, -0.28449672
    %v1087 = vadd.f32 %v1055, -0.28449672
    %v1088 = vadd.f32 %v1056, -0.28449672
    %v1089 = vadd.f32 %v1057, -0.28449672
    %v1090 = vadd.f32 %v1058, -0.28449672
    %v1091 = vadd.f32 %v1059, -0.28449672
    %v1092 = vadd.f32 %v1060, -0.28449672
    %v1093 = vadd.f32 %v1061, -0.28449672
    %v1094 = vadd.f32 %v1062, -0.28449672
    %v1095 = vadd.f32 %v1063, -0.28449672
    %v1096 = vadd.f32 %v1064, -0.28449672
    %v1097 = vadd.f32 %v1065, -0.28449672
    %v1098 = vadd.f32 %v1066, -0.28449672
    %v1099 = vadd.f32 %v1067, -0.28449672
    %v1100 = vadd.f32 %v1068, -0.28449672
    %v1101 = vmul.f32 %v1069, %v443
    %v1102 = vmul.f32 %v1070, %v458
    %v1103 = vmul.f32 %v1071, %v473
    %v1104 = vmul.f32 %v1072, %v488
    %v1105 = vmul.f32 %v1073, %v503
    %v1106 = vmul.f32 %v1074, %v518
    %v1107 = vmul.f32 %v1075, %v533
    %v1108 = vmul.f32 %v1076, %v548
    %v1109 = vmul.f32 %v1077, %v563
    %v1110 = vmul.f32 %v1078, %v578
    %v1111 = vmul.f32 %v1079, %v593
    %v1112 = vmul.f32 %v1080, %v608
    %v1113 = vmul.f32 %v1081, %v623
    %v1114 = vmul.f32 %v1082, %v638
    %v1115 = vmul.f32 %v1083, %v653
    %v1116 = vmul.f32 %v1084, %v668
    %v1117 = vmul.f32 %v1085, %v683
    %v1118 = vmul.f32 %v1086, %v698
    %v1119 = vmul.f32 %v1087, %v713
    %v1120 = vmul.f32 %v1088, %v728
    %v1121 = vmul.f32 %v1089, %v743
    %v1122 = vmul.f32 %v1090, %v758
    %v1123 = vmul.f32 %v1091, %v773
    %v1124 = vmul.f32 %v1092, %v788
    %v1125 = vmul.f32 %v1093, %v803
    %v1126 = vmul.f32 %v1094, %v818
    %v1127 = vmul.f32 %v1095, %v833
    %v1128 = vmul.f32 %v1096, %v848
    %v1129 = vmul.f32 %v1097, %v863
    %v1130 = vmul.f32 %v1098, %v878
    %v1131 = vmul.f32 %v1099, %v893
    %v1132 = vmul.f32 %v1100, %v908
    %v1133 = vadd.f32 %v1101, 0.2548296
    %v1134 = vadd.f32 %v1102, 0.2548296
    %v1135 = vadd.f32 %v1103, 0.2548296
    %v1136 = vadd.f32 %v1104, 0.2548296
    %v1137 = vadd.f32 %v1105, 0.2548296
    %v1138 = vadd.f32 %v1106, 0.2548296
    %v1139 = vadd.f32 %v1107, 0.2548296
    %v1140 = vadd.f32 %v1108, 0.2548296
    %v1141 = vadd.f32 %v1109, 0.2548296
    %v1142 = vadd.f32 %v1110, 0.2548296
    %v1143 = vadd.f32 %v1111, 0.2548296
    %v1144 = vadd.f32 %v1112, 0.2548296
    %v1145 = vadd.f32 %v1113, 0.2548296
    %v1146 = vadd.f32 %v1114, 0.2548296
    %v1147 = vadd.f32 %v1115, 0.2548296
    %v1148 = vadd.f32 %v1116, 0.2548296
    %v1149 = vadd.f32 %v1117, 0.2548296
    %v1150 = vadd.f32 %v1118, 0.2548296
    %v1151 = vadd.f32 %v1119, 0.2548296
    %v1152 = vadd.f32 %v1120, 0.2548296
    %v1153 = vadd.f32 %v1121, 0.2548296
    %v1154 = vadd.f32 %v1122, 0.2548296
    %v1155 = vadd.f32 %v1123, 0.2548296
    %v1156 = vadd.f32 %v1124, 0.2548296
    %v1157 = vadd.f32 %v1125, 0.2548296
    %v1158 = vadd.f32 %v1126, 0.2548296
    %v1159 = vadd.f32 %v1127, 0.2548296
    %v1160 = vadd.f32 %v1128, 0.2548296
    %v1161 = vadd.f32 %v1129, 0.2548296
    %v1162 = vadd.f32 %v1130, 0.2548296
    %v1163 = vadd.f32 %v1131, 0.2548296
    %v1164 = vadd.f32 %v1132, 0.2548296
    %v1165 = vmul.f32 %v1133, %v443
    %v1166 = vmul.f32 %v1134, %v458
    %v1167 = vmul.f32 %v1135, %v473
    %v1168 = vmul.f32 %v1136, %v488
    %v1169 = vmul.f32 %v1137, %v503
    %v1170 = vmul.f32 %v1138, %v518
    %v1171 = vmul.f32 %v1139, %v533
    %v1172 = vmul.f32 %v1140, %v548
    %v1173 = vmul.f32 %v1141, %v563
    %v1174 = vmul.f32 %v1142, %v578
    %v1175 = vmul.f32 %v1143, %v593
    %v1176 = vmul.f32 %v1144, %v608
    %v1177 = vmul.f32 %v1145, %v623
    %v1178 = vmul.f32 %v1146, %v638
    %v1179 = vmul.f32 %v1147, %v653
    %v1180 = vmul.f32 %v1148, %v668
    %v1181 = vmul.f32 %v1149, %v683
    %v1182 = vmul.f32 %v1150, %v698
    %v1183 = vmul.f32 %v1151, %v713
    %v1184 = vmul.f32 %v1152, %v728
    %v1185 = vmul.f32 %v1153, %v743
    %v1186 = vmul.f32 %v1154, %v758
    %v1187 = vmul.f32 %v1155, %v773
    %v1188 = vmul.f32 %v1156, %v788
    %v1189 = vmul.f32 %v1157, %v803
    %v1190 = vmul.f32 %v1158, %v818
    %v1191 = vmul.f32 %v1159, %v833
    %v1192 = vmul.f32 %v1160, %v848
    %v1193 = vmul.f32 %v1161, %v863
    %v1194 = vmul.f32 %v1162, %v878
    %v1195 = vmul.f32 %v1163, %v893
    %v1196 = vmul.f32 %v1164, %v908
    %v1197 = vsub.f32 0.0, %v333
    %v1198 = vsub.f32 0.0, %v334
    %v1199 = vsub.f32 0.0, %v335
    %v1200 = vsub.f32 0.0, %v336
    %v1201 = vsub.f32 0.0, %v337
    %v1202 = vsub.f32 0.0, %v338
    %v1203 = vsub.f32 0.0, %v339
    %v1204 = vsub.f32 0.0, %v340
    %v1205 = vsub.f32 0.0, %v341
    %v1206 = vsub.f32 0.0, %v342
    %v1207 = vsub.f32 0.0, %v343
    %v1208 = vsub.f32 0.0, %v344
    %v1209 = vsub.f32 0.0, %v345
    %v1210 = vsub.f32 0.0, %v346
    %v1211 = vsub.f32 0.0, %v347
    %v1212 = vsub.f32 0.0, %v348
    %v1213 = vsub.f32 0.0, %v349
    %v1214 = vsub.f32 0.0, %v350
    %v1215 = vsub.f32 0.0, %v351
    %v1216 = vsub.f32 0.0, %v352
    %v1217 = vsub.f32 0.0, %v353
    %v1218 = vsub.f32 0.0, %v354
    %v1219 = vsub.f32 0.0, %v355
    %v1220 = vsub.f32 0.0, %v356
    %v1221 = vsub.f32 0.0, %v357
    %v1222 = vsub.f32 0.0, %v358
    %v1223 = vsub.f32 0.0, %v359
    %v1224 = vsub.f32 0.0, %v360
    %v1225 = vsub.f32 0.0, %v361
    %v1226 = vsub.f32 0.0, %v362
    %v1227 = vsub.f32 0.0, %v363
    %v1228 = vsub.f32 0.0, %v364
    %v1229 = vmul.f32 %v1197, %v333
    %v1230 = vmul.f32 %v1198, %v334
    %v1231 = vmul.f32 %v1199, %v335
    %v1232 = vmul.f32 %v1200, %v336
    %v1233 = vmul.f32 %v1201, %v337
    %v1234 = vmul.f32 %v1202, %v338
    %v1235 = vmul.f32 %v1203, %v339
    %v1236 = vmul.f32 %v1204, %v340
    %v1237 = vmul.f32 %v1205, %v341
    %v1238 = vmul.f32 %v1206, %v342
    %v1239 = vmul.f32 %v1207, %v343
    %v1240 = vmul.f32 %v1208, %v344
    %v1241 = vmul.f32 %v1209, %v345
    %v1242 = vmul.f32 %v1210, %v346
    %v1243 = vmul.f32 %v1211, %v347
    %v1244 = vmul.f32 %v1212, %v348
    %v1245 = vmul.f32 %v1213, %v349
    %v1246 = vmul.f32 %v1214, %v350
    %v1247 = vmul.f32 %v1215, %v351
    %v1248 = vmul.f32 %v1216, %v352
    %v1249 = vmul.f32 %v1217, %v353
    %v1250 = vmul.f32 %v1218, %v354
    %v1251 = vmul.f32 %v1219, %v355
    %v1252 = vmul.f32 %v1220, %v356
    %v1253 = vmul.f32 %v1221, %v357
    %v1254 = vmul.f32 %v1222, %v358
    %v1255 = vmul.f32 %v1223, %v359
    %v1256 = vmul.f32 %v1224, %v360
    %v1257 = vmul.f32 %v1225, %v361
    %v1258 = vmul.f32 %v1226, %v362
    %v1259 = vmul.f32 %v1227, %v363
    %v1260 = vmul.f32 %v1228, %v364
    %v1261 = vmul.f32 %v1229, 1.442695
    %v1262 = vpow.pop %v1261
    %v1263 = vmul.f32 %v1230, 1.442695
    %v1264 = vpow.pop %v1263
    %v1265 = vmul.f32 %v1231, 1.442695
    %v1266 = vpow.pop %v1265
    %v1267 = vmul.f32 %v1232, 1.442695
    %v1268 = vpow.pop %v1267
    %v1269 = vmul.f32 %v1233, 1.442695
    %v1270 = vpow.pop %v1269
    %v1271 = vmul.f32 %v1234, 1.442695
    %v1272 = vpow.pop %v1271
    %v1273 = vmul.f32 %v1235, 1.442695
    %v1274 = vpow.pop %v1273
    %v1275 = vmul.f32 %v1236, 1.442695
    %v1276 = vpow.pop %v1275
    %v1277 = vmul.f32 %v1237, 1.442695
    %v1278 = vpow.pop %v1277
    %v1279 = vmul.f32 %v1238, 1.442695
    %v1280 = vpow.pop %v1279
    %v1281 = vmul.f32 %v1239, 1.442695
    %v1282 = vpow.pop %v1281
    %v1283 = vmul.f32 %v1240, 1.442695
    %v1284 = vpow.pop %v1283
    %v1285 = vmul.f32 %v1241, 1.442695
    %v1286 = vpow.pop %v1285
    %v1287 = vmul.f32 %v1242, 1.442695
    %v1288 = vpow.pop %v1287
    %v1289 = vmul.f32 %v1243, 1.442695
    %v1290 = vpow.pop %v1289
    %v1291 = vmul.f32 %v1244, 1.442695
    %v1292 = vpow.pop %v1291
    %v1293 = vmul.f32 %v1245, 1.442695
    %v1294 = vpow.pop %v1293
    %v1295 = vmul.f32 %v1246, 1.442695
    %v1296 = vpow.pop %v1295
    %v1297 = vmul.f32 %v1247, 1.442695
    %v1298 = vpow.pop %v1297
    %v1299 = vmul.f32 %v1248, 1.442695
    %v1300 = vpow.pop %v1299
    %v1301 = vmul.f32 %v1249, 1.442695
    %v1302 = vpow.pop %v1301
    %v1303 = vmul.f32 %v1250, 1.442695
    %v1304 = vpow.pop %v1303
    %v1305 = vmul.f32 %v1251, 1.442695
    %v1306 = vpow.pop %v1305
    %v1307 = vmul.f32 %v1252, 1.442695
    %v1308 = vpow.pop %v1307
    %v1309 = vmul.f32 %v1253, 1.442695
    %v1310 = vpow.pop %v1309
    %v1311 = vmul.f32 %v1254, 1.442695
    %v1312 = vpow.pop %v1311
    %v1313 = vmul.f32 %v1255, 1.442695
    %v1314 = vpow.pop %v1313
    %v1315 = vmul.f32 %v1256, 1.442695
    %v1316 = vpow.pop %v1315
    %v1317 = vmul.f32 %v1257, 1.442695
    %v1318 = vpow.pop %v1317
    %v1319 = vmul.f32 %v1258, 1.442695
    %v1320 = vpow.pop %v1319
    %v1321 = vmul.f32 %v1259, 1.442695
    %v1322 = vpow.pop %v1321
    %v1323 = vmul.f32 %v1260, 1.442695
    %v1324 = vpow.pop %v1323
    %v1325 = vmul.f32 %v1165, %v1262
    %v1326 = vmul.f32 %v1166, %v1264
    %v1327 = vmul.f32 %v1167, %v1266
    %v1328 = vmul.f32 %v1168, %v1268
    %v1329 = vmul.f32 %v1169, %v1270
    %v1330 = vmul.f32 %v1170, %v1272
    %v1331 = vmul.f32 %v1171, %v1274
    %v1332 = vmul.f32 %v1172, %v1276
    %v1333 = vmul.f32 %v1173, %v1278
    %v1334 = vmul.f32 %v1174, %v1280
    %v1335 = vmul.f32 %v1175, %v1282
    %v1336 = vmul.f32 %v1176, %v1284
    %v1337 = vmul.f32 %v1177, %v1286
    %v1338 = vmul.f32 %v1178, %v1288
    %v1339 = vmul.f32 %v1179, %v1290
    %v1340 = vmul.f32 %v1180, %v1292
    %v1341 = vmul.f32 %v1181, %v1294
    %v1342 = vmul.f32 %v1182, %v1296
    %v1343 = vmul.f32 %v1183, %v1298
    %v1344 = vmul.f32 %v1184, %v1300
    %v1345 = vmul.f32 %v1185, %v1302
    %v1346 = vmul.f32 %v1186, %v1304
    %v1347 = vmul.f32 %v1187, %v1306
    %v1348 = vmul.f32 %v1188, %v1308
    %v1349 = vmul.f32 %v1189, %v1310
    %v1350 = vmul.f32 %v1190, %v1312
    %v1351 = vmul.f32 %v1191, %v1314
    %v1352 = vmul.f32 %v1192, %v1316
    %v1353 = vmul.f32 %v1193, %v1318
    %v1354 = vmul.f32 %v1194, %v1320
    %v1355 = vmul.f32 %v1195, %v1322
    %v1356 = vmul.f32 %v1196, %v1324
    %v1357 = vsub.f32 1.0, %v1325
    %v1358 = vsub.f32 1.0, %v1326
    %v1359 = vsub.f32 1.0, %v1327
    %v1360 = vsub.f32 1.0, %v1328
    %v1361 = vsub.f32 1.0, %v1329
    %v1362 = vsub.f32 1.0, %v1330
    %v1363 = vsub.f32 1.0, %v1331
    %v1364 = vsub.f32 1.0, %v1332
    %v1365 = vsub.f32 1.0, %v1333
    %v1366 = vsub.f32 1.0, %v1334
    %v1367 = vsub.f32 1.0, %v1335
    %v1368 = vsub.f32 1.0, %v1336
    %v1369 = vsub.f32 1.0, %v1337
    %v1370 = vsub.f32 1.0, %v1338
    %v1371 = vsub.f32 1.0, %v1339
    %v1372 = vsub.f32 1.0, %v1340
    %v1373 = vsub.f32 1.0, %v1341
    %v1374 = vsub.f32 1.0, %v1342
    %v1375 = vsub.f32 1.0, %v1343
    %v1376 = vsub.f32 1.0, %v1344
    %v1377 = vsub.f32 1.0, %v1345
    %v1378 = vsub.f32 1.0, %v1346
    %v1379 = vsub.f32 1.0, %v1347
    %v1380 = vsub.f32 1.0, %v1348
    %v1381 = vsub.f32 1.0, %v1349
    %v1382 = vsub.f32 1.0, %v1350
    %v1383 = vsub.f32 1.0, %v1351
    %v1384 = vsub.f32 1.0, %v1352
    %v1385 = vsub.f32 1.0, %v1353
    %v1386 = vsub.f32 1.0, %v1354
    %v1387 = vsub.f32 1.0, %v1355
    %v1388 = vsub.f32 1.0, %v1356
    %vm1389 = vcmp.ge.f32.partialorder %v301, 0.0
    %vm1390 = vcmp.ge.f32.partialorder %v302, 0.0
    %vm1391 = vcmp.ge.f32.partialorder %v303, 0.0
    %vm1392 = vcmp.ge.f32.partialorder %v304, 0.0
    %vm1393 = vcmp.ge.f32.partialorder %v305, 0.0
    %vm1394 = vcmp.ge.f32.partialorder %v306, 0.0
    %vm1395 = vcmp.ge.f32.partialorder %v307, 0.0
    %vm1396 = vcmp.ge.f32.partialorder %v308, 0.0
    %vm1397 = vcmp.ge.f32.partialorder %v309, 0.0
    %vm1398 = vcmp.ge.f32.partialorder %v310, 0.0
    %vm1399 = vcmp.ge.f32.partialorder %v311, 0.0
    %vm1400 = vcmp.ge.f32.partialorder %v312, 0.0
    %vm1401 = vcmp.ge.f32.partialorder %v313, 0.0
    %vm1402 = vcmp.ge.f32.partialorder %v314, 0.0
    %vm1403 = vcmp.ge.f32.partialorder %v315, 0.0
    %vm1404 = vcmp.ge.f32.partialorder %v316, 0.0
    %vm1405 = vcmp.ge.f32.partialorder %v317, 0.0
    %vm1406 = vcmp.ge.f32.partialorder %v318, 0.0
    %vm1407 = vcmp.ge.f32.partialorder %v319, 0.0
    %vm1408 = vcmp.ge.f32.partialorder %v320, 0.0
    %vm1409 = vcmp.ge.f32.partialorder %v321, 0.0
    %vm1410 = vcmp.ge.f32.partialorder %v322, 0.0
    %vm1411 = vcmp.ge.f32.partialorder %v323, 0.0
    %vm1412 = vcmp.ge.f32.partialorder %v324, 0.0
    %vm1413 = vcmp.ge.f32.partialorder %v325, 0.0
    %vm1414 = vcmp.ge.f32.partialorder %v326, 0.0
    %vm1415 = vcmp.ge.f32.partialorder %v327, 0.0
    %vm1416 = vcmp.ge.f32.partialorder %v328, 0.0
    %vm1417 = vcmp.ge.f32.partialorder %v329, 0.0
    %vm1418 = vcmp.ge.f32.partialorder %v330, 0.0
    %vm1419 = vcmp.ge.f32.partialorder %v331, 0.0
    %vm1420 = vcmp.ge.f32.partialorder %v332, 0.0
    %v1421 = vsub.f32 0.0, %v1357
    %v1422 = vsub.f32 0.0, %v1358
    %v1423 = vsub.f32 0.0, %v1359
    %v1424 = vsub.f32 0.0, %v1360
    %v1425 = vsub.f32 0.0, %v1361
    %v1426 = vsub.f32 0.0, %v1362
    %v1427 = vsub.f32 0.0, %v1363
    %v1428 = vsub.f32 0.0, %v1364
    %v1429 = vsub.f32 0.0, %v1365
    %v1430 = vsub.f32 0.0, %v1366
    %v1431 = vsub.f32 0.0, %v1367
    %v1432 = vsub.f32 0.0, %v1368
    %v1433 = vsub.f32 0.0, %v1369
    %v1434 = vsub.f32 0.0, %v1370
    %v1435 = vsub.f32 0.0, %v1371
    %v1436 = vsub.f32 0.0, %v1372
    %v1437 = vsub.f32 0.0, %v1373
    %v1438 = vsub.f32 0.0, %v1374
    %v1439 = vsub.f32 0.0, %v1375
    %v1440 = vsub.f32 0.0, %v1376
    %v1441 = vsub.f32 0.0, %v1377
    %v1442 = vsub.f32 0.0, %v1378
    %v1443 = vsub.f32 0.0, %v1379
    %v1444 = vsub.f32 0.0, %v1380
    %v1445 = vsub.f32 0.0, %v1381
    %v1446 = vsub.f32 0.0, %v1382
    %v1447 = vsub.f32 0.0, %v1383
    %v1448 = vsub.f32 0.0, %v1384
    %v1449 = vsub.f32 0.0, %v1385
    %v1450 = vsub.f32 0.0, %v1386
    %v1451 = vsub.f32 0.0, %v1387
    %v1452 = vsub.f32 0.0, %v1388
    %v1453 = vsel %vm1389, %v1357, %v1421
    %v1454 = vsel %vm1390, %v1358, %v1422
    %v1455 = vsel %vm1391, %v1359, %v1423
    %v1456 = vsel %vm1392, %v1360, %v1424
    %v1457 = vsel %vm1393, %v1361, %v1425
    %v1458 = vsel %vm1394, %v1362, %v1426
    %v1459 = vsel %vm1395, %v1363, %v1427
    %v1460 = vsel %vm1396, %v1364, %v1428
    %v1461 = vsel %vm1397, %v1365, %v1429
    %v1462 = vsel %vm1398, %v1366, %v1430
    %v1463 = vsel %vm1399, %v1367, %v1431
    %v1464 = vsel %vm1400, %v1368, %v1432
    %v1465 = vsel %vm1401, %v1369, %v1433
    %v1466 = vsel %vm1402, %v1370, %v1434
    %v1467 = vsel %vm1403, %v1371, %v1435
    %v1468 = vsel %vm1404, %v1372, %v1436
    %v1469 = vsel %vm1405, %v1373, %v1437
    %v1470 = vsel %vm1406, %v1374, %v1438
    %v1471 = vsel %vm1407, %v1375, %v1439
    %v1472 = vsel %vm1408, %v1376, %v1440
    %v1473 = vsel %vm1409, %v1377, %v1441
    %v1474 = vsel %vm1410, %v1378, %v1442
    %v1475 = vsel %vm1411, %v1379, %v1443
    %v1476 = vsel %vm1412, %v1380, %v1444
    %v1477 = vsel %vm1413, %v1381, %v1445
    %v1478 = vsel %vm1414, %v1382, %v1446
    %v1479 = vsel %vm1415, %v1383, %v1447
    %v1480 = vsel %vm1416, %v1384, %v1448
    %v1481 = vsel %vm1417, %v1385, %v1449
    %v1482 = vsel %vm1418, %v1386, %v1450
    %v1483 = vsel %vm1419, %v1387, %v1451
    %v1484 = vsel %vm1420, %v1388, %v1452
    %v1485 = vadd.f32 %v1453, 1.0
    %v1486 = vadd.f32 %v1454, 1.0
    %v1487 = vadd.f32 %v1455, 1.0
    %v1488 = vadd.f32 %v1456, 1.0
    %v1489 = vadd.f32 %v1457, 1.0
    %v1490 = vadd.f32 %v1458, 1.0
    %v1491 = vadd.f32 %v1459, 1.0
    %v1492 = vadd.f32 %v1460, 1.0
    %v1493 = vadd.f32 %v1461, 1.0
    %v1494 = vadd.f32 %v1462, 1.0
    %v1495 = vadd.f32 %v1463, 1.0
    %v1496 = vadd.f32 %v1464, 1.0
    %v1497 = vadd.f32 %v1465, 1.0
    %v1498 = vadd.f32 %v1466, 1.0
    %v1499 = vadd.f32 %v1467, 1.0
    %v1500 = vadd.f32 %v1468, 1.0
    %v1501 = vadd.f32 %v1469, 1.0
    %v1502 = vadd.f32 %v1470, 1.0
    %v1503 = vadd.f32 %v1471, 1.0
    %v1504 = vadd.f32 %v1472, 1.0
    %v1505 = vadd.f32 %v1473, 1.0
    %v1506 = vadd.f32 %v1474, 1.0
    %v1507 = vadd.f32 %v1475, 1.0
    %v1508 = vadd.f32 %v1476, 1.0
    %v1509 = vadd.f32 %v1477, 1.0
    %v1510 = vadd.f32 %v1478, 1.0
    %v1511 = vadd.f32 %v1479, 1.0
    %v1512 = vadd.f32 %v1480, 1.0
    %v1513 = vadd.f32 %v1481, 1.0
    %v1514 = vadd.f32 %v1482, 1.0
    %v1515 = vadd.f32 %v1483, 1.0
    %v1516 = vadd.f32 %v1484, 1.0
    %v1517 = vmul.f32 %v269, %v1485
    %v1518 = vmul.f32 %v270, %v1486
    %v1519 = vmul.f32 %v271, %v1487
    %v1520 = vmul.f32 %v272, %v1488
    %v1521 = vmul.f32 %v273, %v1489
    %v1522 = vmul.f32 %v274, %v1490
    %v1523 = vmul.f32 %v275, %v1491
    %v1524 = vmul.f32 %v276, %v1492
    %v1525 = vmul.f32 %v277, %v1493
    %v1526 = vmul.f32 %v278, %v1494
    %v1527 = vmul.f32 %v279, %v1495
    %v1528 = vmul.f32 %v280, %v1496
    %v1529 = vmul.f32 %v281, %v1497
    %v1530 = vmul.f32 %v282, %v1498
    %v1531 = vmul.f32 %v283, %v1499
    %v1532 = vmul.f32 %v284, %v1500
    %v1533 = vmul.f32 %v285, %v1501
    %v1534 = vmul.f32 %v286, %v1502
    %v1535 = vmul.f32 %v287, %v1503
    %v1536 = vmul.f32 %v288, %v1504
    %v1537 = vmul.f32 %v289, %v1505
    %v1538 = vmul.f32 %v290, %v1506
    %v1539 = vmul.f32 %v291, %v1507
    %v1540 = vmul.f32 %v292, %v1508
    %v1541 = vmul.f32 %v293, %v1509
    %v1542 = vmul.f32 %v294, %v1510
    %v1543 = vmul.f32 %v295, %v1511
    %v1544 = vmul.f32 %v296, %v1512
    %v1545 = vmul.f32 %v297, %v1513
    %v1546 = vmul.f32 %v298, %v1514
    %v1547 = vmul.f32 %v299, %v1515
    %v1548 = vmul.f32 %v300, %v1516
    %v1549 = vld [vmem:[#allocation2] sm:$0xff]
    %v1550 = vld [vmem:[#allocation2 + $0x8] sm:$0xff]
    %v1551 = vld [vmem:[#allocation2 + $0x10] sm:$0xff]
    %v1552 = vld [vmem:[#allocation2 + $0x18] sm:$0xff]
    %v1553 = vld [vmem:[#allocation2 + $0x20] sm:$0xff]
    %v1554 = vld [vmem:[#allocation2 + $0x28] sm:$0xff]
    %v1555 = vld [vmem:[#allocation2 + $0x30] sm:$0xff]
    %v1556 = vld [vmem:[#allocation2 + $0x38] sm:$0xff]
    %v1557 = vld [vmem:[#allocation2 + $0x40] sm:$0xff]
    %v1558 = vld [vmem:[#allocation2 + $0x48] sm:$0xff]
    %v1559 = vld [vmem:[#allocation2 + $0x50] sm:$0xff]
    %v1560 = vld [vmem:[#allocation2 + $0x58] sm:$0xff]
    %v1561 = vld [vmem:[#allocation2 + $0x60] sm:$0xff]
    %v1562 = vld [vmem:[#allocation2 + $0x68] sm:$0xff]
    %v1563 = vld [vmem:[#allocation2 + $0x70] sm:$0xff]
    %v1564 = vld [vmem:[#allocation2 + $0x78] sm:$0xff]
    %v1565 = vld [vmem:[#allocation2 + $0x80] sm:$0xff]
    %v1566 = vld [vmem:[#allocation2 + $0x88] sm:$0xff]
    %v1567 = vld [vmem:[#allocation2 + $0x90] sm:$0xff]
    %v1568 = vld [vmem:[#allocation2 + $0x98] sm:$0xff]
    %v1569 = vld [vmem:[#allocation2 + $0xa0] sm:$0xff]
    %v1570 = vld [vmem:[#allocation2 + $0xa8] sm:$0xff]
    %v1571 = vld [vmem:[#allocation2 + $0xb0] sm:$0xff]
    %v1572 = vld [vmem:[#allocation2 + $0xb8] sm:$0xff]
    %v1573 = vld [vmem:[#allocation2 + $0xc0] sm:$0xff]
    %v1574 = vld [vmem:[#allocation2 + $0xc8] sm:$0xff]
    %v1575 = vld [vmem:[#allocation2 + $0xd0] sm:$0xff]
    %v1576 = vld [vmem:[#allocation2 + $0xd8] sm:$0xff]
    %v1577 = vld [vmem:[#allocation2 + $0xe0] sm:$0xff]
    %v1578 = vld [vmem:[#allocation2 + $0xe8] sm:$0xff]
    %v1579 = vld [vmem:[#allocation2 + $0xf0] sm:$0xff]
    %v1580 = vld [vmem:[#allocation2 + $0xf8] sm:$0xff]
    %v1581 = vld [vmem:[#allocation8] sm:$0xff]
    %v1582 = vld [vmem:[#allocation8 + $0x8] sm:$0xff]
    %v1583 = vld [vmem:[#allocation8 + $0x10] sm:$0xff]
    %v1584 = vld [vmem:[#allocation8 + $0x18] sm:$0xff]
    %v1585 = vld [vmem:[#allocation8 + $0x20] sm:$0xff]
    %v1586 = vld [vmem:[#allocation8 + $0x28] sm:$0xff]
    %v1587 = vld [vmem:[#allocation8 + $0x30] sm:$0xff]
    %v1588 = vld [vmem:[#allocation8 + $0x38] sm:$0xff]
    %v1589 = vld [vmem:[#allocation8 + $0x40] sm:$0xff]
    %v1590 = vld [vmem:[#allocation8 + $0x48] sm:$0xff]
    %v1591 = vld [vmem:[#allocation8 + $0x50] sm:$0xff]
    %v1592 = vld [vmem:[#allocation8 + $0x58] sm:$0xff]
    %v1593 = vld [vmem:[#allocation8 + $0x60] sm:$0xff]
    %v1594 = vld [vmem:[#allocation8 + $0x68] sm:$0xff]
    %v1595 = vld [vmem:[#allocation8 + $0x70] sm:$0xff]
    %v1596 = vld [vmem:[#allocation8 + $0x78] sm:$0xff]
    %1597 = vmatpush.msra.mxu0 %v1596
    %1598 = vmatpush.msra.mxu0 %v1595
    %1599 = vmatpush.msra.mxu0 %v1594
    %1600 = vmatpush.msra.mxu0 %v1593
    %1601 = vmatpush.msra.mxu0 %v1592
    %1602 = vmatpush.msra.mxu0 %v1591
    %1603 = vmatpush.msra.mxu0 %v1590
    %1604 = vmatpush.msra.mxu0 %v1589
    %1605 = vmatpush.msra.mxu0 %v1588
    %1606 = vmatpush.msra.mxu0 %v1587
    %1607 = vmatpush.msra.mxu0 %v1586
    %1608 = vmatpush.msra.mxu0 %v1585
    %1609 = vmatpush.msra.mxu0 %v1584
    %1610 = vmatpush.msra.mxu0 %v1583
    %1611 = vmatpush.msra.mxu0 %v1582
    %1612 = vmatpush.msra.mxu0 %v1581
    %1613 = vmatmul.f32.gmra.mxu0 %v1517
    %v1614 = vpop.f32.mrf.mxu0
    %v1615 = vadd.f32 0.0, %v1614
    %1616 = vmatmul.f32.gmra.mxu0 %v1518
    %v1617 = vpop.f32.mrf.mxu0
    %v1618 = vadd.f32 0.0, %v1617
    %1619 = vmatmul.f32.gmra.mxu0 %v1519
    %v1620 = vpop.f32.mrf.mxu0
    %v1621 = vadd.f32 0.0, %v1620
    %1622 = vmatmul.f32.gmra.mxu0 %v1520
    %v1623 = vpop.f32.mrf.mxu0
    %v1624 = vadd.f32 0.0, %v1623
    %1625 = vmatmul.f32.gmra.mxu0 %v1521
    %v1626 = vpop.f32.mrf.mxu0
    %v1627 = vadd.f32 0.0, %v1626
    %1628 = vmatmul.f32.gmra.mxu0 %v1522
    %v1629 = vpop.f32.mrf.mxu0
    %v1630 = vadd.f32 0.0, %v1629
    %1631 = vmatmul.f32.gmra.mxu0 %v1523
    %v1632 = vpop.f32.mrf.mxu0
    %v1633 = vadd.f32 0.0, %v1632
    %1634 = vmatmul.f32.gmra.mxu0 %v1524
    %v1635 = vpop.f32.mrf.mxu0
    %v1636 = vadd.f32 0.0, %v1635
    %1637 = vmatmul.f32.gmra.mxu0 %v1525
    %v1638 = vpop.f32.mrf.mxu0
    %v1639 = vadd.f32 0.0, %v1638
    %1640 = vmatmul.f32.gmra.mxu0 %v1526
    %v1641 = vpop.f32.mrf.mxu0
    %v1642 = vadd.f32 0.0, %v1641
    %1643 = vmatmul.f32.gmra.mxu0 %v1527
    %v1644 = vpop.f32.mrf.mxu0
    %v1645 = vadd.f32 0.0, %v1644
    %1646 = vmatmul.f32.gmra.mxu0 %v1528
    %v1647 = vpop.f32.mrf.mxu0
    %v1648 = vadd.f32 0.0, %v1647
    %1649 = vmatmul.f32.gmra.mxu0 %v1529
    %v1650 = vpop.f32.mrf.mxu0
    %v1651 = vadd.f32 0.0, %v1650
    %1652 = vmatmul.f32.gmra.mxu0 %v1530
    %v1653 = vpop.f32.mrf.mxu0
    %v1654 = vadd.f32 0.0, %v1653
    %1655 = vmatmul.f32.gmra.mxu0 %v1531
    %v1656 = vpop.f32.mrf.mxu0
    %v1657 = vadd.f32 0.0, %v1656
    %1658 = vmatmul.f32.gmra.mxu0 %v1532
    %v1659 = vpop.f32.mrf.mxu0
    %v1660 = vadd.f32 0.0, %v1659
    %1661 = vmatmul.f32.gmra.mxu0 %v1533
    %v1662 = vpop.f32.mrf.mxu0
    %v1663 = vadd.f32 0.0, %v1662
    %1664 = vmatmul.f32.gmra.mxu0 %v1534
    %v1665 = vpop.f32.mrf.mxu0
    %v1666 = vadd.f32 0.0, %v1665
    %1667 = vmatmul.f32.gmra.mxu0 %v1535
    %v1668 = vpop.f32.mrf.mxu0
    %v1669 = vadd.f32 0.0, %v1668
    %1670 = vmatmul.f32.gmra.mxu0 %v1536
    %v1671 = vpop.f32.mrf.mxu0
    %v1672 = vadd.f32 0.0, %v1671
    %1673 = vmatmul.f32.gmra.mxu0 %v1537
    %v1674 = vpop.f32.mrf.mxu0
    %v1675 = vadd.f32 0.0, %v1674
    %1676 = vmatmul.f32.gmra.mxu0 %v1538
    %v1677 = vpop.f32.mrf.mxu0
    %v1678 = vadd.f32 0.0, %v1677
    %1679 = vmatmul.f32.gmra.mxu0 %v1539
    %v1680 = vpop.f32.mrf.mxu0
    %v1681 = vadd.f32 0.0, %v1680
    %1682 = vmatmul.f32.gmra.mxu0 %v1540
    %v1683 = vpop.f32.mrf.mxu0
    %v1684 = vadd.f32 0.0, %v1683
    %1685 = vmatmul.f32.gmra.mxu0 %v1541
    %v1686 = vpop.f32.mrf.mxu0
    %v1687 = vadd.f32 0.0, %v1686
    %1688 = vmatmul.f32.gmra.mxu0 %v1542
    %v1689 = vpop.f32.mrf.mxu0
    %v1690 = vadd.f32 0.0, %v1689
    %1691 = vmatmul.f32.gmra.mxu0 %v1543
    %v1692 = vpop.f32.mrf.mxu0
    %v1693 = vadd.f32 0.0, %v1692
    %1694 = vmatmul.f32.gmra.mxu0 %v1544
    %v1695 = vpop.f32.mrf.mxu0
    %v1696 = vadd.f32 0.0, %v1695
    %1697 = vmatmul.f32.gmra.mxu0 %v1545
    %v1698 = vpop.f32.mrf.mxu0
    %v1699 = vadd.f32 0.0, %v1698
    %1700 = vmatmul.f32.gmra.mxu0 %v1546
    %v1701 = vpop.f32.mrf.mxu0
    %v1702 = vadd.f32 0.0, %v1701
    %1703 = vmatmul.f32.gmra.mxu0 %v1547
    %v1704 = vpop.f32.mrf.mxu0
    %v1705 = vadd.f32 0.0, %v1704
    %1706 = vmatmul.f32.gmra.mxu0 %v1548
    %v1707 = vpop.f32.mrf.mxu0
    %v1708 = vadd.f32 0.0, %v1707
    %1709 = vdwg.mxu0
    %v1710 = vadd.f32 %v1549, %v1615
    %v1711 = vadd.f32 %v1550, %v1618
    %v1712 = vadd.f32 %v1551, %v1621
    %v1713 = vadd.f32 %v1552, %v1624
    %v1714 = vadd.f32 %v1553, %v1627
    %v1715 = vadd.f32 %v1554, %v1630
    %v1716 = vadd.f32 %v1555, %v1633
    %v1717 = vadd.f32 %v1556, %v1636
    %v1718 = vadd.f32 %v1557, %v1639
    %v1719 = vadd.f32 %v1558, %v1642
    %v1720 = vadd.f32 %v1559, %v1645
    %v1721 = vadd.f32 %v1560, %v1648
    %v1722 = vadd.f32 %v1561, %v1651
    %v1723 = vadd.f32 %v1562, %v1654
    %v1724 = vadd.f32 %v1563, %v1657
    %v1725 = vadd.f32 %v1564, %v1660
    %v1726 = vadd.f32 %v1565, %v1663
    %v1727 = vadd.f32 %v1566, %v1666
    %v1728 = vadd.f32 %v1567, %v1669
    %v1729 = vadd.f32 %v1568, %v1672
    %v1730 = vadd.f32 %v1569, %v1675
    %v1731 = vadd.f32 %v1570, %v1678
    %v1732 = vadd.f32 %v1571, %v1681
    %v1733 = vadd.f32 %v1572, %v1684
    %v1734 = vadd.f32 %v1573, %v1687
    %v1735 = vadd.f32 %v1574, %v1690
    %v1736 = vadd.f32 %v1575, %v1693
    %v1737 = vadd.f32 %v1576, %v1696
    %v1738 = vadd.f32 %v1577, %v1699
    %v1739 = vadd.f32 %v1578, %v1702
    %v1740 = vadd.f32 %v1579, %v1705
    %v1741 = vadd.f32 %v1580, %v1708
    %1742 = vst [vmem:[#allocation2] sm:$0xff] %v1710
    %1743 = vst [vmem:[#allocation2 + $0x8] sm:$0xff] %v1711
    %1744 = vst [vmem:[#allocation2 + $0x10] sm:$0xff] %v1712
    %1745 = vst [vmem:[#allocation2 + $0x18] sm:$0xff] %v1713
    %1746 = vst [vmem:[#allocation2 + $0x20] sm:$0xff] %v1714
    %1747 = vst [vmem:[#allocation2 + $0x28] sm:$0xff] %v1715
    %1748 = vst [vmem:[#allocation2 + $0x30] sm:$0xff] %v1716
    %1749 = vst [vmem:[#allocation2 + $0x38] sm:$0xff] %v1717
    %1750 = vst [vmem:[#allocation2 + $0x40] sm:$0xff] %v1718
    %1751 = vst [vmem:[#allocation2 + $0x48] sm:$0xff] %v1719
    %1752 = vst [vmem:[#allocation2 + $0x50] sm:$0xff] %v1720
    %1753 = vst [vmem:[#allocation2 + $0x58] sm:$0xff] %v1721
    %1754 = vst [vmem:[#allocation2 + $0x60] sm:$0xff] %v1722
    %1755 = vst [vmem:[#allocation2 + $0x68] sm:$0xff] %v1723
    %1756 = vst [vmem:[#allocation2 + $0x70] sm:$0xff] %v1724
    %1757 = vst [vmem:[#allocation2 + $0x78] sm:$0xff] %v1725
    %1758 = vst [vmem:[#allocation2 + $0x80] sm:$0xff] %v1726
    %1759 = vst [vmem:[#allocation2 + $0x88] sm:$0xff] %v1727
    %1760 = vst [vmem:[#allocation2 + $0x90] sm:$0xff] %v1728
    %1761 = vst [vmem:[#allocation2 + $0x98] sm:$0xff] %v1729
    %1762 = vst [vmem:[#allocation2 + $0xa0] sm:$0xff] %v1730
    %1763 = vst [vmem:[#allocation2 + $0xa8] sm:$0xff] %v1731
    %1764 = vst [vmem:[#allocation2 + $0xb0] sm:$0xff] %v1732
    %1765 = vst [vmem:[#allocation2 + $0xb8] sm:$0xff] %v1733
    %1766 = vst [vmem:[#allocation2 + $0xc0] sm:$0xff] %v1734
    %1767 = vst [vmem:[#allocation2 + $0xc8] sm:$0xff] %v1735
    %1768 = vst [vmem:[#allocation2 + $0xd0] sm:$0xff] %v1736
    %1769 = vst [vmem:[#allocation2 + $0xd8] sm:$0xff] %v1737
    %1770 = vst [vmem:[#allocation2 + $0xe0] sm:$0xff] %v1738
    %1771 = vst [vmem:[#allocation2 + $0xe8] sm:$0xff] %v1739
    %1772 = vst [vmem:[#allocation2 + $0xf0] sm:$0xff] %v1740
    %1773 = vst [vmem:[#allocation2 + $0xf8] sm:$0xff] %v1741
    // Predicated region
    $region38: #{tpu_custom_call.1} parent=1 // pred_check
      %p1774 = pneg %p68
    $region39: #{tpu_custom_call.1} parent=1 // pred_check_branch
      %1776 = sbr.rel (%p1774) target = $region41
    $region40: #{tpu_custom_call.1} parent=1 // pred_region
      %v1777 = vld [vmem:[#allocation2] sm:$0xff]
      %v1778 = vld [vmem:[#allocation2 + $0x8] sm:$0xff]
      %v1779 = vld [vmem:[#allocation2 + $0x10] sm:$0xff]
      %v1780 = vld [vmem:[#allocation2 + $0x18] sm:$0xff]
      %v1781 = vld [vmem:[#allocation2 + $0x20] sm:$0xff]
      %v1782 = vld [vmem:[#allocation2 + $0x28] sm:$0xff]
      %v1783 = vld [vmem:[#allocation2 + $0x30] sm:$0xff]
      %v1784 = vld [vmem:[#allocation2 + $0x38] sm:$0xff]
      %v1785 = vld [vmem:[#allocation2 + $0x40] sm:$0xff]
      %v1786 = vld [vmem:[#allocation2 + $0x48] sm:$0xff]
      %v1787 = vld [vmem:[#allocation2 + $0x50] sm:$0xff]
      %v1788 = vld [vmem:[#allocation2 + $0x58] sm:$0xff]
      %v1789 = vld [vmem:[#allocation2 + $0x60] sm:$0xff]
      %v1790 = vld [vmem:[#allocation2 + $0x68] sm:$0xff]
      %v1791 = vld [vmem:[#allocation2 + $0x70] sm:$0xff]
      %v1792 = vld [vmem:[#allocation2 + $0x78] sm:$0xff]
      %v1793 = vld [vmem:[#allocation2 + $0x80] sm:$0xff]
      %v1794 = vld [vmem:[#allocation2 + $0x88] sm:$0xff]
      %v1795 = vld [vmem:[#allocation2 + $0x90] sm:$0xff]
      %v1796 = vld [vmem:[#allocation2 + $0x98] sm:$0xff]
      %v1797 = vld [vmem:[#allocation2 + $0xa0] sm:$0xff]
      %v1798 = vld [vmem:[#allocation2 + $0xa8] sm:$0xff]
      %v1799 = vld [vmem:[#allocation2 + $0xb0] sm:$0xff]
      %v1800 = vld [vmem:[#allocation2 + $0xb8] sm:$0xff]
      %v1801 = vld [vmem:[#allocation2 + $0xc0] sm:$0xff]
      %v1802 = vld [vmem:[#allocation2 + $0xc8] sm:$0xff]
      %v1803 = vld [vmem:[#allocation2 + $0xd0] sm:$0xff]
      %v1804 = vld [vmem:[#allocation2 + $0xd8] sm:$0xff]
      %v1805 = vld [vmem:[#allocation2 + $0xe0] sm:$0xff]
      %v1806 = vld [vmem:[#allocation2 + $0xe8] sm:$0xff]
      %v1807 = vld [vmem:[#allocation2 + $0xf0] sm:$0xff]
      %v1808 = vld [vmem:[#allocation2 + $0xf8] sm:$0xff]
      %v1809 = vld [vmem:[%s4] sm:$0x1]
      %v1811 = vperm.slane %v1809, 0
      %v1813 = vadd.f32 %v1777, %v1811
      %v1814 = vadd.f32 %v1778, %v1811
      %v1815 = vadd.f32 %v1779, %v1811
      %v1816 = vadd.f32 %v1780, %v1811
      %v1817 = vadd.f32 %v1781, %v1811
      %v1818 = vadd.f32 %v1782, %v1811
      %v1819 = vadd.f32 %v1783, %v1811
      %v1820 = vadd.f32 %v1784, %v1811
      %v1821 = vadd.f32 %v1785, %v1811
      %v1822 = vadd.f32 %v1786, %v1811
      %v1823 = vadd.f32 %v1787, %v1811
      %v1824 = vadd.f32 %v1788, %v1811
      %v1825 = vadd.f32 %v1789, %v1811
      %v1826 = vadd.f32 %v1790, %v1811
      %v1827 = vadd.f32 %v1791, %v1811
      %v1828 = vadd.f32 %v1792, %v1811
      %v1829 = vadd.f32 %v1793, %v1811
      %v1830 = vadd.f32 %v1794, %v1811
      %v1831 = vadd.f32 %v1795, %v1811
      %v1832 = vadd.f32 %v1796, %v1811
      %v1833 = vadd.f32 %v1797, %v1811
      %v1834 = vadd.f32 %v1798, %v1811
      %v1835 = vadd.f32 %v1799, %v1811
      %v1836 = vadd.f32 %v1800, %v1811
      %v1837 = vadd.f32 %v1801, %v1811
      %v1838 = vadd.f32 %v1802, %v1811
      %v1839 = vadd.f32 %v1803, %v1811
      %v1840 = vadd.f32 %v1804, %v1811
      %v1841 = vadd.f32 %v1805, %v1811
      %v1842 = vadd.f32 %v1806, %v1811
      %v1843 = vadd.f32 %v1807, %v1811
      %v1844 = vadd.f32 %v1808, %v1811
      %1845 = vst [vmem:[#allocation9] sm:$0xff] %v1813
      %1846 = vst [vmem:[#allocation9 + $0x8] sm:$0xff] %v1814
      %1847 = vst [vmem:[#allocation9 + $0x10] sm:$0xff] %v1815
      %1848 = vst [vmem:[#allocation9 + $0x18] sm:$0xff] %v1816
      %1849 = vst [vmem:[#allocation9 + $0x20] sm:$0xff] %v1817
      %1850 = vst [vmem:[#allocation9 + $0x28] sm:$0xff] %v1818
      %1851 = vst [vmem:[#allocation9 + $0x30] sm:$0xff] %v1819
      %1852 = vst [vmem:[#allocation9 + $0x38] sm:$0xff] %v1820
      %1853 = vst [vmem:[#allocation9 + $0x40] sm:$0xff] %v1821
      %1854 = vst [vmem:[#allocation9 + $0x48] sm:$0xff] %v1822
      %1855 = vst [vmem:[#allocation9 + $0x50] sm:$0xff] %v1823
      %1856 = vst [vmem:[#allocation9 + $0x58] sm:$0xff] %v1824
      %1857 = vst [vmem:[#allocation9 + $0x60] sm:$0xff] %v1825
      %1858 = vst [vmem:[#allocation9 + $0x68] sm:$0xff] %v1826
      %1859 = vst [vmem:[#allocation9 + $0x70] sm:$0xff] %v1827
      %1860 = vst [vmem:[#allocation9 + $0x78] sm:$0xff] %v1828
      %1861 = vst [vmem:[#allocation9 + $0x80] sm:$0xff] %v1829
      %1862 = vst [vmem:[#allocation9 + $0x88] sm:$0xff] %v1830
      %1863 = vst [vmem:[#allocation9 + $0x90] sm:$0xff] %v1831
      %1864 = vst [vmem:[#allocation9 + $0x98] sm:$0xff] %v1832
      %1865 = vst [vmem:[#allocation9 + $0xa0] sm:$0xff] %v1833
      %1866 = vst [vmem:[#allocation9 + $0xa8] sm:$0xff] %v1834
      %1867 = vst [vmem:[#allocation9 + $0xb0] sm:$0xff] %v1835
      %1868 = vst [vmem:[#allocation9 + $0xb8] sm:$0xff] %v1836
      %1869 = vst [vmem:[#allocation9 + $0xc0] sm:$0xff] %v1837
      %1870 = vst [vmem:[#allocation9 + $0xc8] sm:$0xff] %v1838
      %1871 = vst [vmem:[#allocation9 + $0xd0] sm:$0xff] %v1839
      %1872 = vst [vmem:[#allocation9 + $0xd8] sm:$0xff] %v1840
      %1873 = vst [vmem:[#allocation9 + $0xe0] sm:$0xff] %v1841
      %1874 = vst [vmem:[#allocation9 + $0xe8] sm:$0xff] %v1842
      %1875 = vst [vmem:[#allocation9 + $0xf0] sm:$0xff] %v1843
      %1876 = vst [vmem:[#allocation9 + $0xf8] sm:$0xff] %v1844
    $region41: #{tpu_custom_call.1} parent=1 // pred_fallthru
      _
    // Predicated region
    $region42: #{tpu_custom_call.1} parent=1 // pred_check
      _
    $region43: #{tpu_custom_call.1} parent=1 // pred_check_branch
      %1878 = sbr.rel (0) target = $region45
    $region44: #{tpu_custom_call.1} parent=1 // pred_region
      %1880 = vsyncadd [#allocation5], 0
      %s1881 = sshll.u32 [#allocation9], 4
      %s1882 = int_to_ptr.vmem [resolvable:$true] %s1881
      %s1883 = sshll.u32 %s5, 4
      %s1884 = int_to_ptr.hbm [resolvable:$true] %s1883
      %1889 = dma.vmem_to_hbm [thread:$0]  %s1882, 4096, %s1884, [#allocation5], 128, 128, 8
    $region45: #{tpu_custom_call.1} parent=1 // pred_fallthru
      _
    // Predicated region
    $region46: #{tpu_custom_call.1} parent=1 // pred_check
      _
    $region47: #{tpu_custom_call.1} parent=1 // pred_check_branch
      %1891 = sbr.rel (0) target = $region49
    $region48: #{tpu_custom_call.1} parent=1 // pred_region
      %1893 = dma.done [#allocation5], 4096
    $region49: #{tpu_custom_call.1} parent=1 // pred_fallthru
      _
    %1894 = vsyncpa [#allocation4], 1
    %1895 = vsyncpa [#allocation7], 1
    %1896 = vsyncpa [#allocation5], 1

</llo_original>
